<compile_context>
chip_gen: v7x
topology: tpu7x:2x2x1
jax: 0.10.0
libtpu: 0.0.40
codegen_flags: <defaults>
</compile_context>

<pallas_src>
import functools
import math

import jax
import jax.numpy as jnp
from jax.experimental import pallas as pl
from jax.experimental.pallas import tpu as pltpu


def _ffn_kernel(x_ref, xt_ref, xb_ref, w_in_ref, b_in_ref, w_dw_ref, b_dw_ref,
                w_out_ref, b_out_ref, o_ref, *, W, tile_rows):
    # x_ref:     (1, dim, TL)     centre rows of this tile, lane = pixels
    # xt_ref:    (1, 1, dim, W)   row just above the tile (clamped at image top)
    # xb_ref:    (1, 1, dim, W)   row just below the tile (clamped at image bottom)
    # w_in_ref:  (C2, dim)        project_in weight, C2 = 2*hidden
    # b_in_ref:  (C2, 1)
    # w_dw_ref:  (9, C2, 1)       depthwise 3x3 taps, tap-major
    # b_dw_ref:  (C2, 1)
    # w_out_ref: (dim, hidden)    project_out weight
    # b_out_ref: (dim, 1)
    # o_ref:     (1, dim, TL)
    TR = tile_rows
    TL = TR * W                       # centre pixels of this tile
    L = TL + 2 * W                    # + one halo row above and below
    C2 = w_in_ref.shape[0]
    hidden = C2 // 2
    r = pl.program_id(1)
    last_r = pl.num_programs(1) - 1

    # halo-extended input: [row above | TR tile rows | row below]
    xh = jnp.concatenate([xt_ref[0, 0], x_ref[0], xb_ref[0, 0]], axis=1)  # (dim, L)

    # ---- project_in: 1x1 conv == channel matmul (native dtype into the MXU) ----
    h = jnp.dot(w_in_ref[...], xh, preferred_element_type=jnp.float32)
    h = h + b_in_ref[...].astype(jnp.float32)                             # (C2, L)

    # ---- cheap (1, L) boundary masks, applied once to the conv *sources* ------
    lane = jax.lax.broadcasted_iota(jnp.int32, (1, L), 1)
    col = lane % W
    top_outside = jnp.logical_and(lane < W, r == 0)            # halo row above image
    bot_outside = jnp.logical_and(lane >= L - W, r == last_r)  # halo row below image
    inside = jnp.logical_not(jnp.logical_or(top_outside, bot_outside))
    h0 = jnp.where(inside, h, 0.0)            # source for dj == 0 taps
    hl = jnp.where(col < W - 1, h0, 0.0)      # source for dj == -1 taps
    hr = jnp.where(col >= 1, h0, 0.0)         # source for dj == +1 taps

    # ---- depthwise 3x3 conv (padding=1) via lane rolls on the halo buffer -----
    w_dw = w_dw_ref[...].astype(jnp.float32)                   # (9, C2, 1)
    b_dw = b_dw_ref[...].astype(jnp.float32)                   # (C2, 1)
    acc = b_dw + w_dw[4] * h0                                  # bias + centre tap
    for di in (-1, 0, 1):
        for dj in (-1, 0, 1):
            if di == 0 and dj == 0:
                continue
            src = hl if dj == -1 else (hr if dj == 1 else h0)
            shift = di * W + dj                                # flat-pixel offset
            nbr = pltpu.roll(src, (-shift) % L, axis=1)
            acc = acc + w_dw[(di + 1) * 3 + (dj + 1)] * nbr

    hdw = acc[:, W:W + TL]                                     # (C2, TL) centre rows

    # ---- gated GELU:  g(x2)*x1 + g(x1)*x2 == 0.5*x1*x2*(2 + erf(c*x1) + erf(c*x2))
    x1 = hdw[:hidden, :]
    x2 = hdw[hidden:, :]
    c = jnp.float32(0.7071067811865476)
    gated = (0.5 * x1 * x2) * (2.0 + jax.lax.erf(x1 * c) + jax.lax.erf(x2 * c))

    # ---- project_out: 1x1 conv == channel matmul ------------------------------
    w_out = w_out_ref[...]
    y = jnp.dot(w_out, gated.astype(w_out.dtype), preferred_element_type=jnp.float32)
    y = y + b_out_ref[...].astype(jnp.float32)                 # (dim, TL) f32
    o_ref[0] = y.astype(o_ref.dtype)


def _pick_tile_rows(H, W, N, C2, hidden, dim):
    """Row-tile picker: divides H, lane-aligned (tile_rows*W % 128 == 0 or whole
    image), tile f32 intermediates fit a ~20 MiB budget, >= 2 row tiles when
    N == 1 so both v7x TensorCores have work, and >= ~2048 lanes when possible."""
    cands = [d for d in range(1, H + 1)
             if H % d == 0 and ((d * W) % 128 == 0 or d == H)]

    def tile_f32_bytes(tr):
        L = (tr + 2) * W
        return 4 * (6 * C2 * L + 2 * C2 * tr * W + 4 * hidden * tr * W + 3 * dim * L)

    fit = [d for d in cands if tile_f32_bytes(d) <= (20 << 20)] or [min(cands)]
    if N == 1:
        sub = [d for d in fit if d < H]
        if sub:
            fit = sub
    big = [d for d in fit if d * W >= 2048]
    return min(big) if big else max(fit)


def _vmem_limit_bytes(estimate):
    try:
        phys = int(pltpu.get_tpu_info().vmem_capacity_bytes)
    except Exception:
        phys = 64 << 20                      # conservative (v7x) fallback
    return int(min(max(estimate + (4 << 20), 32 << 20), int(phys * 0.85)))


def feedforward_forward(x_nchw, w_in, b_in, w_dw, b_dw, w_out, b_out, *,
                        tile_rows=None):
    """x_nchw: (N, dim, H, W); w_in: (C2, dim); b_in: (C2,); w_dw: (C2, 3, 3);
    b_dw: (C2,); w_out: (dim, hidden); b_out: (dim,). Returns (N, dim, H, W).
    For v6e/v7x production, pass x and the weights in bf16 (matmuls run in the
    operands' native dtype); elementwise math stays f32 inside the kernel."""
    N, dim, H, W = x_nchw.shape
    C2 = w_in.shape[0]
    hidden = C2 // 2
    HW = H * W

    if tile_rows is None:
        tile_rows = _pick_tile_rows(H, W, N, C2, hidden, dim)
    TR = tile_rows
    if H % TR != 0:
        raise ValueError("tile_rows must divide H")
    if TR != H and (TR * W) % 128 != 0:
        raise ValueError("tile_rows*W must be a multiple of 128 unless tile_rows == H")
    R = H // TR
    TL = TR * W
    L = TL + 2 * W

    # NCHW -> (N, dim, H*W): free contiguous view, no transpose / HBM round-trip.
    x3 = x_nchw.reshape(N, dim, HW)

    # Per-tile halo rows (row above / below each tile, clamped at the image edge;
    # the kernel masks the clamped copies back to zero-padding semantics).  This
    # is a tiny gather: 2 rows per tile ~= 2/TR of x, no 3x read amplification.
    tiles = jnp.arange(R)
    top_rows = jnp.maximum(tiles * TR - 1, 0)
    bot_rows = jnp.minimum(tiles * TR + TR, H - 1)
    x_top = jnp.transpose(jnp.take(x_nchw, top_rows, axis=2), (0, 2, 1, 3))  # (N,R,dim,W)
    x_bot = jnp.transpose(jnp.take(x_nchw, bot_rows, axis=2), (0, 2, 1, 3))  # (N,R,dim,W)

    b_in2 = b_in.reshape(C2, 1)
    b_dw2 = b_dw.reshape(C2, 1)
    b_out2 = b_out.reshape(dim, 1)
    # depthwise taps tap-major: (9, C2, 1) so the kernel reads one (C2, 1) per tap
    w_dw9 = jnp.transpose(w_dw.reshape(C2, 9), (1, 0))[:, :, None]

    itemsize = x_nchw.dtype.itemsize
    param_elems = C2 * dim + 9 * C2 + 2 * C2 + dim * hidden + dim
    # Tile-sized VMEM budget: double-buffered I/O blocks + (double-buffered)
    # weights + f32 temporaries of one tile.
    io_bytes = 2 * itemsize * (2 * dim * TL + 2 * dim * W)          # in+out, x2 buffers
    weight_bytes = 2 * param_elems * itemsize
    inter_bytes = 4 * (6 * C2 * L + 2 * C2 * TL + 4 * hidden * TL + 3 * dim * L)
    vmem_limit = _vmem_limit_bytes(io_bytes + weight_bytes + inter_bytes)

    flops = 2 * N * HW * (C2 * dim + hidden * dim) + N * HW * C2 * 2 * 9
    transcendentals = 2 * N * HW * hidden
    bytes_accessed = (2 + 2.0 / TR) * N * dim * HW * itemsize + param_elems * itemsize

    kernel = functools.partial(_ffn_kernel, W=W, tile_rows=TR)

    # NOTE: the constant-index weight specs could be single-buffered
    # (pipeline_mode=pl.Buffered(1)) to reclaim a little VMEM headroom.
    out3 = pl.pallas_call(
        kernel,
        out_shape=jax.ShapeDtypeStruct((N, dim, HW), x_nchw.dtype),
        grid_spec=pltpu.PrefetchScalarGridSpec(
            num_scalar_prefetch=0,
            grid=(N, R),
            in_specs=[
                pl.BlockSpec((1, dim, TL), lambda n, r: (n, 0, r)),
                pl.BlockSpec((1, 1, dim, W), lambda n, r: (n, r, 0, 0)),
                pl.BlockSpec((1, 1, dim, W), lambda n, r: (n, r, 0, 0)),
                pl.BlockSpec((C2, dim), lambda n, r: (0, 0)),
                pl.BlockSpec((C2, 1), lambda n, r: (0, 0)),
                pl.BlockSpec((9, C2, 1), lambda n, r: (0, 0, 0)),
                pl.BlockSpec((C2, 1), lambda n, r: (0, 0)),
                pl.BlockSpec((dim, hidden), lambda n, r: (0, 0)),
                pl.BlockSpec((dim, 1), lambda n, r: (0, 0)),
            ],
            out_specs=pl.BlockSpec((1, dim, TL), lambda n, r: (n, 0, r)),
        ),
        compiler_params=pltpu.CompilerParams(
            dimension_semantics=("parallel", "parallel"),
            vmem_limit_bytes=vmem_limit),
        cost_estimate=pl.CostEstimate(
            flops=int(flops), transcendentals=int(transcendentals),
            bytes_accessed=int(bytes_accessed)),
    )(x3, x_top, x_bot, w_in, b_in2, w_dw9, b_dw2, w_out, b_out2)

    return out3.reshape(N, dim, H, W)   # (N, dim, H*W) -> NCHW, free reshape


# ----------------------------- pure-JAX reference -----------------------------

def _depthwise3x3_ref(h, w_dw, b_dw):
    # h: (N, C2, H, W) f32; w_dw: (C2, 3, 3); b_dw: (C2,)
    _, _, H, W = h.shape
    hp = jnp.pad(h, ((0, 0), (0, 0), (1, 1), (1, 1)))
    out = jnp.zeros_like(h)
    for ki in range(3):
        for kj in range(3):
            out = out + w_dw[None, :, ki, kj, None, None] * hp[:, :, ki:ki + H, kj:kj + W]
    return out + b_dw[None, :, None, None]


def feedforward_reference(x, w_in, b_in, w_dw, b_dw, w_out, b_out):
    xf = x.astype(jnp.float32)
    C2 = w_in.shape[0]
    hidden = C2 // 2
    h = jnp.einsum('ncij,kc->nkij', xf, w_in.astype(jnp.float32)) \
        + b_in.astype(jnp.float32)[None, :, None, None]
    hdw = _depthwise3x3_ref(h, w_dw.astype(jnp.float32), b_dw.astype(jnp.float32))
    x1, x2 = hdw[:, :hidden], hdw[:, hidden:]

    def g(t):
        return 0.5 * t * (1.0 + jax.lax.erf(t * jnp.float32(0.7071067811865476)))

    gated = g(x2) * x1 + g(x1) * x2
    y = jnp.einsum('nkij,dk->ndij', gated, w_out.astype(jnp.float32)) \
        + b_out.astype(jnp.float32)[None, :, None, None]
    return y.astype(x.dtype)


def _uniform(key, shape, bound, dtype=jnp.float32):
    return jax.random.uniform(key, shape, dtype, -bound, bound)


if __name__ == "__main__":
    key = jax.random.PRNGKey(0)
    keys = jax.random.split(key, 7)

    N, dim, H, W = 2, 8, 16, 128
    ffn_expansion_factor = 2.0
    hidden = int(dim * ffn_expansion_factor)   # 16
    C2 = hidden * 2                            # 32

    x = jax.random.normal(keys[0], (N, dim, H, W), jnp.float32)

    # PyTorch Conv2d default init: uniform(-1/sqrt(fan_in), 1/sqrt(fan_in))
    b_pin = 1.0 / math.sqrt(dim)          # project_in: fan_in = dim * 1 * 1
    w_in = _uniform(keys[1], (C2, dim), b_pin)
    b_in = _uniform(keys[2], (C2,), b_pin)

    b_dwc = 1.0 / math.sqrt(9.0)          # depthwise: fan_in = 1 * 3 * 3
    w_dw = _uniform(keys[3], (C2, 3, 3), b_dwc)
    b_dw = _uniform(keys[4], (C2,), b_dwc)

    b_pout = 1.0 / math.sqrt(hidden)      # project_out: fan_in = hidden * 1 * 1
    w_out = _uniform(keys[5], (dim, hidden), b_pout)
    b_out = _uniform(keys[6], (dim,), b_pout)

    # tile_rows=4 -> 4 row tiles per image (512-lane tiles): exercises the
    # top-edge, middle (both real halos) and bottom-edge tile paths.
    out = feedforward_forward(x, w_in, b_in, w_dw, b_dw, w_out, b_out, tile_rows=4)
    out = jax.block_until_ready(out)

    ref = feedforward_reference(x, w_in, b_in, w_dw, b_dw, w_out, b_out)
    assert out.shape == (N, dim, H, W)
    assert jnp.allclose(out, ref, atol=1e-4, rtol=1e-4)

    print("KERNEL_OK")
</pallas_src>

<mosaic_0001>
module attributes {stable_mosaic.version = 11 : i64} {
  func.func @_ffn_kernel(%arg0: i32, %arg1: i32, %arg2: memref<1x8x512xf32, #tpu.memory_space<vmem>>, %arg3: memref<1x1x8x128xf32, #tpu.memory_space<vmem>>, %arg4: memref<1x1x8x128xf32, #tpu.memory_space<vmem>>, %arg5: memref<32x8xf32, #tpu.memory_space<vmem>>, %arg6: memref<32x1xf32, #tpu.memory_space<vmem>>, %arg7: memref<9x32x1xf32, #tpu.memory_space<vmem>>, %arg8: memref<32x1xf32, #tpu.memory_space<vmem>>, %arg9: memref<8x16xf32, #tpu.memory_space<vmem>>, %arg10: memref<8x1xf32, #tpu.memory_space<vmem>>, %arg11: memref<1x8x512xf32, #tpu.memory_space<vmem>>) attributes {dimension_semantics = [#tpu.dimension_semantics<parallel>, #tpu.dimension_semantics<parallel>], iteration_bounds = array<i64: 2, 4>, scalar_prefetch = 0 : i64, scratch_operands = 0 : i64, tpu.core_type = #tpu.core_type<tc>, window_params = [{transform_indices = @transform_0, window_bounds = array<i64: 1, 8, 512>}, {transform_indices = @transform_1, window_bounds = array<i64: 1, 1, 8, 128>}, {transform_indices = @transform_2, window_bounds = array<i64: 1, 1, 8, 128>}, {pipeline_mode = #tpu.pipeline_mode<synchronous>, transform_indices = @transform_3, window_bounds = array<i64: 32, 8>}, {pipeline_mode = #tpu.pipeline_mode<synchronous>, transform_indices = @transform_4, window_bounds = array<i64: 32, 1>}, {pipeline_mode = #tpu.pipeline_mode<synchronous>, transform_indices = @transform_5, window_bounds = array<i64: 9, 32, 1>}, {pipeline_mode = #tpu.pipeline_mode<synchronous>, transform_indices = @transform_6, window_bounds = array<i64: 32, 1>}, {pipeline_mode = #tpu.pipeline_mode<synchronous>, transform_indices = @transform_7, window_bounds = array<i64: 8, 16>}, {pipeline_mode = #tpu.pipeline_mode<synchronous>, transform_indices = @transform_8, window_bounds = array<i64: 8, 1>}, {transform_indices = @transform_9, window_bounds = array<i64: 1, 8, 512>}]} {
    %c0 = arith.constant 0 : index
    %c0_0 = arith.constant 0 : index
    %c0_1 = arith.constant 0 : index
    %c0_2 = arith.constant 0 : index
    %0 = vector.load %arg3[%c0, %c0_0, %c0_1, %c0_2] : memref<1x1x8x128xf32, #tpu.memory_space<vmem>>, vector<1x1x8x128xf32>
    %1 = vector.shape_cast %0 : vector<1x1x8x128xf32> to vector<8x128xf32>
    %c0_3 = arith.constant 0 : index
    %c0_4 = arith.constant 0 : index
    %c0_5 = arith.constant 0 : index
    %2 = vector.load %arg2[%c0_3, %c0_4, %c0_5] : memref<1x8x512xf32, #tpu.memory_space<vmem>>, vector<1x8x512xf32>
    %3 = vector.shape_cast %2 : vector<1x8x512xf32> to vector<8x512xf32>
    %c0_6 = arith.constant 0 : index
    %c0_7 = arith.constant 0 : index
    %c0_8 = arith.constant 0 : index
    %c0_9 = arith.constant 0 : index
    %4 = vector.load %arg4[%c0_6, %c0_7, %c0_8, %c0_9] : memref<1x1x8x128xf32, #tpu.memory_space<vmem>>, vector<1x1x8x128xf32>
    %5 = vector.shape_cast %4 : vector<1x1x8x128xf32> to vector<8x128xf32>
    %6 = tpu.concatenate %1, %3, %5 in 1 : vector<8x128xf32>, vector<8x512xf32>, vector<8x128xf32> -> vector<8x768xf32>
    %c0_10 = arith.constant 0 : index
    %c0_11 = arith.constant 0 : index
    %7 = vector.load %arg5[%c0_10, %c0_11] : memref<32x8xf32, #tpu.memory_space<vmem>>, vector<32x8xf32>
    %cst = arith.constant dense<0.000000e+00> : vector<32x768xf32>
    %8 = tpu.matmul %7, %6, %cst {dimension_numbers = #tpu.dot_dimension_numbers<[1], [0], [0], [1], [0, 0, 1, 1], [], []>} : vector<32x8xf32>, vector<8x768xf32>, vector<32x768xf32> -> vector<32x768xf32>
    %c0_12 = arith.constant 0 : index
    %c0_13 = arith.constant 0 : index
    %9 = vector.load %arg6[%c0_12, %c0_13] : memref<32x1xf32, #tpu.memory_space<vmem>>, vector<32x1xf32>
    %10 = vector.broadcast %9 : vector<32x1xf32> to vector<32x768xf32>
    %11 = arith.addf %8, %10 : vector<32x768xf32>
    %12 = tpu.iota {dimensions = array<i32: 1>} : vector<1x768xi32>
    %c128_i32 = arith.constant 128 : i32
    %c0_i32 = arith.constant 0 : i32
    %13 = arith.cmpi eq, %c128_i32, %c0_i32 : i32
    %c1_i32 = arith.constant 1 : i32
    %14 = arith.select %13, %c1_i32, %c128_i32 : i32
    %15 = vector.broadcast %14 : i32 to vector<1x768xi32>
    %16 = arith.remsi %12, %15 : vector<1x768xi32>
    %c0_i32_14 = arith.constant 0 : i32
    %17 = vector.broadcast %c0_i32_14 : i32 to vector<1x768xi32>
    %18 = arith.cmpi ne, %16, %17 : vector<1x768xi32>
    %c0_i32_15 = arith.constant 0 : i32
    %19 = vector.broadcast %c0_i32_15 : i32 to vector<1x768xi32>
    %20 = arith.cmpi slt, %16, %19 : vector<1x768xi32>
    %c0_i32_16 = arith.constant 0 : i32
    %21 = arith.cmpi slt, %14, %c0_i32_16 : i32
    %22 = vector.broadcast %21 : i1 to vector<1x768xi1>
    %23 = vector.broadcast %22 : vector<1x768xi1> to vector<1x768xi1>
    %24 = arith.xori %20, %23 : vector<1x768xi1>
    %25 = arith.andi %24, %18 : vector<1x768xi1>
    %26 = vector.broadcast %14 : i32 to vector<1x768xi32>
    %27 = arith.addi %16, %26 : vector<1x768xi32>
    %28 = arith.select %25, %27, %16 : vector<1x768xi1>, vector<1x768xi32>
    %c128_i32_17 = arith.constant 128 : i32
    %29 = vector.broadcast %c128_i32_17 : i32 to vector<1x768xi32>
    %30 = arith.cmpi slt, %12, %29 : vector<1x768xi32>
    %c0_i32_18 = arith.constant 0 : i32
    %31 = arith.cmpi eq, %arg1, %c0_i32_18 : i32
    %32 = vector.broadcast %31 : i1 to vector<1x768xi1>
    %33 = arith.andi %30, %32 : vector<1x768xi1>
    %c640_i32 = arith.constant 640 : i32
    %34 = vector.broadcast %c640_i32 : i32 to vector<1x768xi32>
    %35 = arith.cmpi sge, %12, %34 : vector<1x768xi32>
    %c3_i32 = arith.constant 3 : i32
    %36 = arith.cmpi eq, %arg1, %c3_i32 : i32
    %37 = vector.broadcast %36 : i1 to vector<1x768xi1>
    %38 = arith.andi %35, %37 : vector<1x768xi1>
    %39 = arith.ori %33, %38 : vector<1x768xi1>
    %cst_19 = arith.constant dense<true> : vector<1x768xi1>
    %40 = arith.xori %39, %cst_19 : vector<1x768xi1>
    %cst_20 = arith.constant 0.000000e+00 : f32
    %41 = vector.shape_cast %40 : vector<1x768xi1> to vector<1x768xi1>
    %42 = vector.broadcast %41 : vector<1x768xi1> to vector<32x768xi1>
    %43 = vector.broadcast %cst_20 : f32 to vector<32x768xf32>
    %44 = arith.select %42, %11, %43 : vector<32x768xi1>, vector<32x768xf32>
    %c127_i32 = arith.constant 127 : i32
    %45 = vector.broadcast %c127_i32 : i32 to vector<1x768xi32>
    %46 = arith.cmpi slt, %28, %45 : vector<1x768xi32>
    %cst_21 = arith.constant 0.000000e+00 : f32
    %47 = vector.shape_cast %46 : vector<1x768xi1> to vector<1x768xi1>
    %48 = vector.broadcast %47 : vector<1x768xi1> to vector<32x768xi1>
    %49 = vector.broadcast %cst_21 : f32 to vector<32x768xf32>
    %50 = arith.select %48, %44, %49 : vector<32x768xi1>, vector<32x768xf32>
    %c1_i32_22 = arith.constant 1 : i32
    %51 = vector.broadcast %c1_i32_22 : i32 to vector<1x768xi32>
    %52 = arith.cmpi sge, %28, %51 : vector<1x768xi32>
    %cst_23 = arith.constant 0.000000e+00 : f32
    %53 = vector.shape_cast %52 : vector<1x768xi1> to vector<1x768xi1>
    %54 = vector.broadcast %53 : vector<1x768xi1> to vector<32x768xi1>
    %55 = vector.broadcast %cst_23 : f32 to vector<32x768xf32>
    %56 = arith.select %54, %44, %55 : vector<32x768xi1>, vector<32x768xf32>
    %c0_24 = arith.constant 0 : index
    %c0_25 = arith.constant 0 : index
    %c0_26 = arith.constant 0 : index
    %57 = vector.load %arg7[%c0_24, %c0_25, %c0_26] : memref<9x32x1xf32, #tpu.memory_space<vmem>>, vector<9x32x1xf32>
    %c0_27 = arith.constant 0 : index
    %c0_28 = arith.constant 0 : index
    %58 = vector.load %arg8[%c0_27, %c0_28] : memref<32x1xf32, #tpu.memory_space<vmem>>, vector<32x1xf32>
    %59 = vector.extract_strided_slice %57 {offsets = [4, 0, 0], sizes = [1, 32, 1], strides = [1, 1, 1]} : vector<9x32x1xf32> to vector<1x32x1xf32>
    %60 = vector.shape_cast %59 : vector<1x32x1xf32> to vector<32x1xf32>
    %61 = vector.broadcast %60 : vector<32x1xf32> to vector<32x768xf32>
    %62 = arith.mulf %61, %44 : vector<32x768xf32>
    %63 = vector.broadcast %58 : vector<32x1xf32> to vector<32x768xf32>
    %64 = arith.addf %63, %62 : vector<32x768xf32>
    %c129_i32 = arith.constant 129 : i32
    %65 = tpu.dynamic_rotate %50 by %c129_i32 dim 1 : vector<32x768xf32>, i32 -> vector<32x768xf32>
    %66 = vector.extract_strided_slice %57 {offsets = [0, 0, 0], sizes = [1, 32, 1], strides = [1, 1, 1]} : vector<9x32x1xf32> to vector<1x32x1xf32>
    %67 = vector.shape_cast %66 : vector<1x32x1xf32> to vector<32x1xf32>
    %68 = vector.broadcast %67 : vector<32x1xf32> to vector<32x768xf32>
    %69 = arith.mulf %68, %65 : vector<32x768xf32>
    %70 = arith.addf %64, %69 : vector<32x768xf32>
    %c128_i32_29 = arith.constant 128 : i32
    %71 = tpu.dynamic_rotate %44 by %c128_i32_29 dim 1 : vector<32x768xf32>, i32 -> vector<32x768xf32>
    %72 = vector.extract_strided_slice %57 {offsets = [1, 0, 0], sizes = [1, 32, 1], strides = [1, 1, 1]} : vector<9x32x1xf32> to vector<1x32x1xf32>
    %73 = vector.shape_cast %72 : vector<1x32x1xf32> to vector<32x1xf32>
    %74 = vector.broadcast %73 : vector<32x1xf32> to vector<32x768xf32>
    %75 = arith.mulf %74, %71 : vector<32x768xf32>
    %76 = arith.addf %70, %75 : vector<32x768xf32>
    %c127_i32_30 = arith.constant 127 : i32
    %77 = tpu.dynamic_rotate %56 by %c127_i32_30 dim 1 : vector<32x768xf32>, i32 -> vector<32x768xf32>
    %78 = vector.extract_strided_slice %57 {offsets = [2, 0, 0], sizes = [1, 32, 1], strides = [1, 1, 1]} : vector<9x32x1xf32> to vector<1x32x1xf32>
    %79 = vector.shape_cast %78 : vector<1x32x1xf32> to vector<32x1xf32>
    %80 = vector.broadcast %79 : vector<32x1xf32> to vector<32x768xf32>
    %81 = arith.mulf %80, %77 : vector<32x768xf32>
    %82 = arith.addf %76, %81 : vector<32x768xf32>
    %c1_i32_31 = arith.constant 1 : i32
    %83 = tpu.dynamic_rotate %50 by %c1_i32_31 dim 1 : vector<32x768xf32>, i32 -> vector<32x768xf32>
    %84 = vector.extract_strided_slice %57 {offsets = [3, 0, 0], sizes = [1, 32, 1], strides = [1, 1, 1]} : vector<9x32x1xf32> to vector<1x32x1xf32>
    %85 = vector.shape_cast %84 : vector<1x32x1xf32> to vector<32x1xf32>
    %86 = vector.broadcast %85 : vector<32x1xf32> to vector<32x768xf32>
    %87 = arith.mulf %86, %83 : vector<32x768xf32>
    %88 = arith.addf %82, %87 : vector<32x768xf32>
    %c767_i32 = arith.constant 767 : i32
    %89 = tpu.dynamic_rotate %56 by %c767_i32 dim 1 : vector<32x768xf32>, i32 -> vector<32x768xf32>
    %90 = vector.extract_strided_slice %57 {offsets = [5, 0, 0], sizes = [1, 32, 1], strides = [1, 1, 1]} : vector<9x32x1xf32> to vector<1x32x1xf32>
    %91 = vector.shape_cast %90 : vector<1x32x1xf32> to vector<32x1xf32>
    %92 = vector.broadcast %91 : vector<32x1xf32> to vector<32x768xf32>
    %93 = arith.mulf %92, %89 : vector<32x768xf32>
    %94 = arith.addf %88, %93 : vector<32x768xf32>
    %c641_i32 = arith.constant 641 : i32
    %95 = tpu.dynamic_rotate %50 by %c641_i32 dim 1 : vector<32x768xf32>, i32 -> vector<32x768xf32>
    %96 = vector.extract_strided_slice %57 {offsets = [6, 0, 0], sizes = [1, 32, 1], strides = [1, 1, 1]} : vector<9x32x1xf32> to vector<1x32x1xf32>
    %97 = vector.shape_cast %96 : vector<1x32x1xf32> to vector<32x1xf32>
    %98 = vector.broadcast %97 : vector<32x1xf32> to vector<32x768xf32>
    %99 = arith.mulf %98, %95 : vector<32x768xf32>
    %100 = arith.addf %94, %99 : vector<32x768xf32>
    %c640_i32_32 = arith.constant 640 : i32
    %101 = tpu.dynamic_rotate %44 by %c640_i32_32 dim 1 : vector<32x768xf32>, i32 -> vector<32x768xf32>
    %102 = vector.extract_strided_slice %57 {offsets = [7, 0, 0], sizes = [1, 32, 1], strides = [1, 1, 1]} : vector<9x32x1xf32> to vector<1x32x1xf32>
    %103 = vector.shape_cast %102 : vector<1x32x1xf32> to vector<32x1xf32>
    %104 = vector.broadcast %103 : vector<32x1xf32> to vector<32x768xf32>
    %105 = arith.mulf %104, %101 : vector<32x768xf32>
    %106 = arith.addf %100, %105 : vector<32x768xf32>
    %c639_i32 = arith.constant 639 : i32
    %107 = tpu.dynamic_rotate %56 by %c639_i32 dim 1 : vector<32x768xf32>, i32 -> vector<32x768xf32>
    %108 = vector.extract_strided_slice %57 {offsets = [8, 0, 0], sizes = [1, 32, 1], strides = [1, 1, 1]} : vector<9x32x1xf32> to vector<1x32x1xf32>
    %109 = vector.shape_cast %108 : vector<1x32x1xf32> to vector<32x1xf32>
    %110 = vector.broadcast %109 : vector<32x1xf32> to vector<32x768xf32>
    %111 = arith.mulf %110, %107 : vector<32x768xf32>
    %112 = arith.addf %106, %111 : vector<32x768xf32>
    %113 = vector.extract_strided_slice %112 {offsets = [0, 128], sizes = [32, 512], strides = [1, 1]} : vector<32x768xf32> to vector<32x512xf32>
    %114 = vector.extract_strided_slice %113 {offsets = [0, 0], sizes = [16, 512], strides = [1, 1]} : vector<32x512xf32> to vector<16x512xf32>
    %115 = vector.extract_strided_slice %113 {offsets = [16, 0], sizes = [16, 512], strides = [1, 1]} : vector<32x512xf32> to vector<16x512xf32>
    %cst_33 = arith.constant 5.000000e-01 : f32
    %116 = vector.broadcast %cst_33 : f32 to vector<16x512xf32>
    %117 = arith.mulf %116, %114 : vector<16x512xf32>
    %118 = arith.mulf %117, %115 : vector<16x512xf32>
    %cst_34 = arith.constant 0.707106769 : f32
    %119 = vector.broadcast %cst_34 : f32 to vector<16x512xf32>
    %120 = arith.mulf %114, %119 : vector<16x512xf32>
    %121 = math.erf %120 : vector<16x512xf32>
    %cst_35 = arith.constant 2.000000e+00 : f32
    %122 = vector.broadcast %cst_35 : f32 to vector<16x512xf32>
    %123 = arith.addf %122, %121 : vector<16x512xf32>
    %cst_36 = arith.constant 0.707106769 : f32
    %124 = vector.broadcast %cst_36 : f32 to vector<16x512xf32>
    %125 = arith.mulf %115, %124 : vector<16x512xf32>
    %126 = math.erf %125 : vector<16x512xf32>
    %127 = arith.addf %123, %126 : vector<16x512xf32>
    %128 = arith.mulf %118, %127 : vector<16x512xf32>
    %c0_37 = arith.constant 0 : index
    %c0_38 = arith.constant 0 : index
    %129 = vector.load %arg9[%c0_37, %c0_38] : memref<8x16xf32, #tpu.memory_space<vmem>>, vector<8x16xf32>
    %cst_39 = arith.constant dense<0.000000e+00> : vector<8x512xf32>
    %130 = tpu.matmul %129, %128, %cst_39 {dimension_numbers = #tpu.dot_dimension_numbers<[1], [0], [0], [1], [0, 0, 1, 1], [], []>} : vector<8x16xf32>, vector<16x512xf32>, vector<8x512xf32> -> vector<8x512xf32>
    %c0_40 = arith.constant 0 : index
    %c0_41 = arith.constant 0 : index
    %131 = vector.load %arg10[%c0_40, %c0_41] : memref<8x1xf32, #tpu.memory_space<vmem>>, vector<8x1xf32>
    %132 = vector.broadcast %131 : vector<8x1xf32> to vector<8x512xf32>
    %133 = arith.addf %130, %132 : vector<8x512xf32>
    %c0_42 = arith.constant 0 : index
    %c0_43 = arith.constant 0 : index
    %c0_44 = arith.constant 0 : index
    %134 = vector.load %arg11[%c0_42, %c0_43, %c0_44] : memref<1x8x512xf32, #tpu.memory_space<vmem>>, vector<1x8x512xf32>
    %135 = vector.shape_cast %134 : vector<1x8x512xf32> to vector<8x512xf32>
    %136 = vector.shape_cast %133 : vector<8x512xf32> to vector<1x8x512xf32>
    tpu.vector_store %arg11[%c0_42, %c0_43, %c0_44], %136 {strides = array<i32>} : memref<1x8x512xf32, #tpu.memory_space<vmem>>, vector<1x8x512xf32>,
    return
  }
  func.func @transform_0(%arg0: i32, %arg1: i32) -> (i32, i32, i32) {
    %c0_i32 = arith.constant 0 : i32
    %c0_i32_0 = arith.constant 0 : i32
    return %arg0, %c0_i32, %arg1 : i32, i32, i32
  }
  func.func @transform_1(%arg0: i32, %arg1: i32) -> (i32, i32, i32, i32) {
    %c0_i32 = arith.constant 0 : i32
    %c0_i32_0 = arith.constant 0 : i32
    %c0_i32_1 = arith.constant 0 : i32
    return %arg0, %arg1, %c0_i32, %c0_i32_0 : i32, i32, i32, i32
  }
  func.func @transform_2(%arg0: i32, %arg1: i32) -> (i32, i32, i32, i32) {
    %c0_i32 = arith.constant 0 : i32
    %c0_i32_0 = arith.constant 0 : i32
    %c0_i32_1 = arith.constant 0 : i32
    return %arg0, %arg1, %c0_i32, %c0_i32_0 : i32, i32, i32, i32
  }
  func.func @transform_3(%arg0: i32, %arg1: i32) -> (i32, i32) {
    %c0_i32 = arith.constant 0 : i32
    %c0_i32_0 = arith.constant 0 : i32
    %c0_i32_1 = arith.constant 0 : i32
    return %c0_i32, %c0_i32_0 : i32, i32
  }
  func.func @transform_4(%arg0: i32, %arg1: i32) -> (i32, i32) {
    %c0_i32 = arith.constant 0 : i32
    %c0_i32_0 = arith.constant 0 : i32
    %c0_i32_1 = arith.constant 0 : i32
    return %c0_i32, %c0_i32_0 : i32, i32
  }
  func.func @transform_5(%arg0: i32, %arg1: i32) -> (i32, i32, i32) {
    %c0_i32 = arith.constant 0 : i32
    %c0_i32_0 = arith.constant 0 : i32
    %c0_i32_1 = arith.constant 0 : i32
    %c0_i32_2 = arith.constant 0 : i32
    return %c0_i32, %c0_i32_0, %c0_i32_1 : i32, i32, i32
  }
  func.func @transform_6(%arg0: i32, %arg1: i32) -> (i32, i32) {
    %c0_i32 = arith.constant 0 : i32
    %c0_i32_0 = arith.constant 0 : i32
    %c0_i32_1 = arith.constant 0 : i32
    return %c0_i32, %c0_i32_0 : i32, i32
  }
  func.func @transform_7(%arg0: i32, %arg1: i32) -> (i32, i32) {
    %c0_i32 = arith.constant 0 : i32
    %c0_i32_0 = arith.constant 0 : i32
    %c0_i32_1 = arith.constant 0 : i32
    return %c0_i32, %c0_i32_0 : i32, i32
  }
  func.func @transform_8(%arg0: i32, %arg1: i32) -> (i32, i32) {
    %c0_i32 = arith.constant 0 : i32
    %c0_i32_0 = arith.constant 0 : i32
    %c0_i32_1 = arith.constant 0 : i32
    return %c0_i32, %c0_i32_0 : i32, i32
  }
  func.func @transform_9(%arg0: i32, %arg1: i32) -> (i32, i32, i32) {
    %c0_i32 = arith.constant 0 : i32
    %c0_i32_0 = arith.constant 0 : i32
    return %arg0, %c0_i32, %arg1 : i32, i32, i32
  }
}

</mosaic_0001>

<llo_original>
// kernel: tpu_custom_call.1
$region0: #{tpu_custom_call.1}
  #allocation0 [shape = 'u32[]', space=smem, size = 0x4, offset = 0x4, fixed_abs, tag = 'smem constant byte address 0x4 - core index']
  #allocation1 [shape = 'u32[144,128]{1,0:T(1,128)}', space=vmem, size = 0x12000, scoped, tag = 'internal scratch']
  %s0 = inlined_call_operand.vmem [shape: f32[2,8,2048], index: 0, kind: input, shape index: {}]
  %s1 = inlined_call_operand.vmem [shape: f32[2,4,8,128], index: 1, kind: input, shape index: {}]
  %s2 = inlined_call_operand.vmem [shape: f32[2,4,8,128], index: 2, kind: input, shape index: {}]
  %s3 = inlined_call_operand.vmem [shape: f32[32,8], index: 3, kind: input, shape index: {}]
  %s4 = inlined_call_operand.vmem [shape: f32[32,1], index: 4, kind: input, shape index: {}]
  %s5 = inlined_call_operand.vmem [shape: f32[9,32,1], index: 5, kind: input, shape index: {}]
  %s6 = inlined_call_operand.vmem [shape: f32[32,1], index: 6, kind: input, shape index: {}]
  %s7 = inlined_call_operand.vmem [shape: f32[8,16], index: 7, kind: input, shape index: {}]
  %s8 = inlined_call_operand.vmem [shape: f32[8,1], index: 8, kind: input, shape index: {}]
  %s9 = inlined_call_operand.hbm [shape: f32[2,8,2048], index: 9, kind: output, shape index: {}]
  %s10 = sld [smem:[#allocation0]]
  $region69: #{tpu_custom_call.1} parent=0
    _
  %s12 = ssub.s32 1, %s10
  %s13 = scalar_select 0, %s12, %s10
  $region1: #{tpu_custom_call.1} parent=0
    #allocation2 [shape = 'u8[32768]{0}', space=vmem, size = 0x8000, scoped, tag = 'output window, operand 0']
    #allocation3 [shape = 's32[2]{0}', space=sflag, size = 0x8, scoped, tag = 'scoped memory for tpu_custom_call.1']
    %14 = vsyncpa [#allocation3], 0
    %s15 = scalar_lea.sflag [#allocation3], 1
    %16 = vsyncpa %s15, 0
    loop: start=0, step=1, limit=10
    $region2: #{tpu_custom_call.1} parent=1 // loop_pre_header
      _
    $region3: #{tpu_custom_call.1} parent=1 // loop_header
      %s18 = sphi 0, %s22
      %p19 = scmp.ge.s32.totalorder %s18, 10
      %s25 = sphi 0, %s37
      %s26 = sphi 0, %s33
      %s27 = sphi 0, %s25
      %s28 = sphi 0, %s26
      %s29 = sphi 0, %s27
      %s30 = sphi 0, %s28
      %s42 = sphi 0, %s44
      %s45 = sphi 0, %s42
      %s46 = sphi 0, %s45
      %s62 = sphi 0, %s46
      %s70 = sphi 0, %s72
      %s73 = sphi 0, %s70
      %s74 = sphi 0, %s73
      %s90 = sphi 0, %s74
      %s98 = sphi 0, %s100
      %s101 = sphi 0, %s98
      %s102 = sphi 0, %s101
      %s118 = sphi 0, %s102
      %s122 = sphi 0, %s122
      %s124 = sphi 0, %s122
      %s125 = sphi 0, %s124
      %s139 = sphi 0, %s125
      %s143 = sphi 0, %s143
      %s145 = sphi 0, %s143
      %s146 = sphi 0, %s145
      %s160 = sphi 0, %s146
      %s164 = sphi 0, %s164
      %s166 = sphi 0, %s164
      %s167 = sphi 0, %s166
      %s181 = sphi 0, %s167
      %s185 = sphi 0, %s185
      %s187 = sphi 0, %s185
      %s188 = sphi 0, %s187
      %s202 = sphi 0, %s188
      %s206 = sphi 0, %s206
      %s208 = sphi 0, %s206
      %s209 = sphi 0, %s208
      %s223 = sphi 0, %s209
      %s227 = sphi 0, %s227
      %s229 = sphi 0, %s227
      %s230 = sphi 0, %s229
      %s244 = sphi 0, %s230
      %s252 = sphi 0, %s254
      %s255 = sphi 0, %s252
      %s256 = sphi 0, %s255
      %s272 = sphi 0, %s256
    $region4: #{tpu_custom_call.1} parent=1 // loop_header_branch
      %21 = sbr.rel (%p19) target = $region8
    $region5: #{tpu_custom_call.1} parent=1 // loop_body
      %s23 = ssub.s32 %s18, 1
      %s24 = ssub.s32 %s18, 2
      %s31 = sadd.s32 1, %s26
      %p32 = scmp.ge.s32.totalorder %s31, 4
      %s33 = scalar_select %p32, 0, %s31
      %s34 = sadd.s32 1, %s25
      %s35 = scalar_select %p32, %s34, %s25
      %p36 = scmp.ge.s32.totalorder %s35, 2
      %s37 = scalar_select %p36, 0, %s35
      %s38 = ssub.s32 %s25, %s37
      %s39 = ssub.s32 %s26, %s33
      %s40 = sor.u32 %s38, %s39
      %p41 = scmp.eq.s32.totalorder %s40, 0
      %s43 = sadd.s32 %s42, 1
      %s44 = scalar_select %p41, %s42, %s43
      %p47 = pneg %p41
      %p48 = scmp.eq.s32.totalorder %s18, 7
      %p49 = por %p47, %p48
      %p50 = scmp.ne.s32.totalorder %s42, %s45
      %p51 = scmp.eq.s32.totalorder %s18, 0
      %p52 = por %p50, %p51
      %p53 = scmp.ne.s32.totalorder %s42, %s45
      %p54 = scmp.eq.s32.totalorder %s23, 7
      %p55 = por %p53, %p54
      %p56 = scmp.ne.s32.totalorder %s45, %s46
      %p57 = scmp.eq.s32.totalorder %s23, 0
      %p58 = por %p56, %p57
      %p59 = scmp.ne.s32.totalorder %s45, %s46
      %p60 = scmp.eq.s32.totalorder %s24, 7
      %p61 = por %p59, %p60
      %p63 = scmp.ne.s32.totalorder %s46, %s62
      %p64 = scmp.eq.s32.totalorder %s24, 0
      %p65 = por %p63, %p64
      %s66 = ssub.s32 %s25, %s37
      %s67 = ssub.s32 %s26, %s33
      %s68 = sor.u32 %s66, %s67
      %p69 = scmp.eq.s32.totalorder %s68, 0
      %s71 = sadd.s32 %s70, 1
      %s72 = scalar_select %p69, %s70, %s71
      %p75 = pneg %p69
      %p76 = scmp.eq.s32.totalorder %s18, 7
      %p77 = por %p75, %p76
      %p78 = scmp.ne.s32.totalorder %s70, %s73
      %p79 = scmp.eq.s32.totalorder %s18, 0
      %p80 = por %p78, %p79
      %p81 = scmp.ne.s32.totalorder %s70, %s73
      %p82 = scmp.eq.s32.totalorder %s23, 7
      %p83 = por %p81, %p82
      %p84 = scmp.ne.s32.totalorder %s73, %s74
      %p85 = scmp.eq.s32.totalorder %s23, 0
      %p86 = por %p84, %p85
      %p87 = scmp.ne.s32.totalorder %s73, %s74
      %p88 = scmp.eq.s32.totalorder %s24, 7
      %p89 = por %p87, %p88
      %p91 = scmp.ne.s32.totalorder %s74, %s90
      %p92 = scmp.eq.s32.totalorder %s24, 0
      %p93 = por %p91, %p92
      %s94 = ssub.s32 %s25, %s37
      %s95 = ssub.s32 %s26, %s33
      %s96 = sor.u32 %s94, %s95
      %p97 = scmp.eq.s32.totalorder %s96, 0
      %s99 = sadd.s32 %s98, 1
      %s100 = scalar_select %p97, %s98, %s99
      %p103 = pneg %p97
      %p104 = scmp.eq.s32.totalorder %s18, 7
      %p105 = por %p103, %p104
      %p106 = scmp.ne.s32.totalorder %s98, %s101
      %p107 = scmp.eq.s32.totalorder %s18, 0
      %p108 = por %p106, %p107
      %p109 = scmp.ne.s32.totalorder %s98, %s101
      %p110 = scmp.eq.s32.totalorder %s23, 7
      %p111 = por %p109, %p110
      %p112 = scmp.ne.s32.totalorder %s101, %s102
      %p113 = scmp.eq.s32.totalorder %s23, 0
      %p114 = por %p112, %p113
      %p115 = scmp.ne.s32.totalorder %s101, %s102
      %p116 = scmp.eq.s32.totalorder %s24, 7
      %p117 = por %p115, %p116
      %p119 = scmp.ne.s32.totalorder %s102, %s118
      %p120 = scmp.eq.s32.totalorder %s24, 0
      %p121 = por %p119, %p120
      %s123 = sadd.s32 %s122, 1
      %p126 = scmp.eq.s32.totalorder %s18, 7
      %p127 = scmp.ne.s32.totalorder %s122, %s124
      %p128 = scmp.eq.s32.totalorder %s18, 0
      %p129 = por %p127, %p128
      %p130 = scmp.ne.s32.totalorder %s122, %s124
      %p131 = scmp.eq.s32.totalorder %s23, 7
      %p132 = por %p130, %p131
      %p133 = scmp.ne.s32.totalorder %s124, %s125
      %p134 = scmp.eq.s32.totalorder %s23, 0
      %p135 = por %p133, %p134
      %p136 = scmp.ne.s32.totalorder %s124, %s125
      %p137 = scmp.eq.s32.totalorder %s24, 7
      %p138 = por %p136, %p137
      %p140 = scmp.ne.s32.totalorder %s125, %s139
      %p141 = scmp.eq.s32.totalorder %s24, 0
      %p142 = por %p140, %p141
      %s144 = sadd.s32 %s143, 1
      %p147 = scmp.eq.s32.totalorder %s18, 7
      %p148 = scmp.ne.s32.totalorder %s143, %s145
      %p149 = scmp.eq.s32.totalorder %s18, 0
      %p150 = por %p148, %p149
      %p151 = scmp.ne.s32.totalorder %s143, %s145
      %p152 = scmp.eq.s32.totalorder %s23, 7
      %p153 = por %p151, %p152
      %p154 = scmp.ne.s32.totalorder %s145, %s146
      %p155 = scmp.eq.s32.totalorder %s23, 0
      %p156 = por %p154, %p155
      %p157 = scmp.ne.s32.totalorder %s145, %s146
      %p158 = scmp.eq.s32.totalorder %s24, 7
      %p159 = por %p157, %p158
      %p161 = scmp.ne.s32.totalorder %s146, %s160
      %p162 = scmp.eq.s32.totalorder %s24, 0
      %p163 = por %p161, %p162
      %s165 = sadd.s32 %s164, 1
      %p168 = scmp.eq.s32.totalorder %s18, 7
      %p169 = scmp.ne.s32.totalorder %s164, %s166
      %p170 = scmp.eq.s32.totalorder %s18, 0
      %p171 = por %p169, %p170
      %p172 = scmp.ne.s32.totalorder %s164, %s166
      %p173 = scmp.eq.s32.totalorder %s23, 7
      %p174 = por %p172, %p173
      %p175 = scmp.ne.s32.totalorder %s166, %s167
      %p176 = scmp.eq.s32.totalorder %s23, 0
      %p177 = por %p175, %p176
      %p178 = scmp.ne.s32.totalorder %s166, %s167
      %p179 = scmp.eq.s32.totalorder %s24, 7
      %p180 = por %p178, %p179
      %p182 = scmp.ne.s32.totalorder %s167, %s181
      %p183 = scmp.eq.s32.totalorder %s24, 0
      %p184 = por %p182, %p183
      %s186 = sadd.s32 %s185, 1
      %p189 = scmp.eq.s32.totalorder %s18, 7
      %p190 = scmp.ne.s32.totalorder %s185, %s187
      %p191 = scmp.eq.s32.totalorder %s18, 0
      %p192 = por %p190, %p191
      %p193 = scmp.ne.s32.totalorder %s185, %s187
      %p194 = scmp.eq.s32.totalorder %s23, 7
      %p195 = por %p193, %p194
      %p196 = scmp.ne.s32.totalorder %s187, %s188
      %p197 = scmp.eq.s32.totalorder %s23, 0
      %p198 = por %p196, %p197
      %p199 = scmp.ne.s32.totalorder %s187, %s188
      %p200 = scmp.eq.s32.totalorder %s24, 7
      %p201 = por %p199, %p200
      %p203 = scmp.ne.s32.totalorder %s188, %s202
      %p204 = scmp.eq.s32.totalorder %s24, 0
      %p205 = por %p203, %p204
      %s207 = sadd.s32 %s206, 1
      %p210 = scmp.eq.s32.totalorder %s18, 7
      %p211 = scmp.ne.s32.totalorder %s206, %s208
      %p212 = scmp.eq.s32.totalorder %s18, 0
      %p213 = por %p211, %p212
      %p214 = scmp.ne.s32.totalorder %s206, %s208
      %p215 = scmp.eq.s32.totalorder %s23, 7
      %p216 = por %p214, %p215
      %p217 = scmp.ne.s32.totalorder %s208, %s209
      %p218 = scmp.eq.s32.totalorder %s23, 0
      %p219 = por %p217, %p218
      %p220 = scmp.ne.s32.totalorder %s208, %s209
      %p221 = scmp.eq.s32.totalorder %s24, 7
      %p222 = por %p220, %p221
      %p224 = scmp.ne.s32.totalorder %s209, %s223
      %p225 = scmp.eq.s32.totalorder %s24, 0
      %p226 = por %p224, %p225
      %s228 = sadd.s32 %s227, 1
      %p231 = scmp.eq.s32.totalorder %s18, 7
      %p232 = scmp.ne.s32.totalorder %s227, %s229
      %p233 = scmp.eq.s32.totalorder %s18, 0
      %p234 = por %p232, %p233
      %p235 = scmp.ne.s32.totalorder %s227, %s229
      %p236 = scmp.eq.s32.totalorder %s23, 7
      %p237 = por %p235, %p236
      %p238 = scmp.ne.s32.totalorder %s229, %s230
      %p239 = scmp.eq.s32.totalorder %s23, 0
      %p240 = por %p238, %p239
      %p241 = scmp.ne.s32.totalorder %s229, %s230
      %p242 = scmp.eq.s32.totalorder %s24, 7
      %p243 = por %p241, %p242
      %p245 = scmp.ne.s32.totalorder %s230, %s244
      %p246 = scmp.eq.s32.totalorder %s24, 0
      %p247 = por %p245, %p246
      %s248 = ssub.s32 %s25, %s37
      %s249 = ssub.s32 %s26, %s33
      %s250 = sor.u32 %s248, %s249
      %p251 = scmp.eq.s32.totalorder %s250, 0
      %s253 = sadd.s32 %s252, 1
      %s254 = scalar_select %p251, %s252, %s253
      %p257 = pneg %p251
      %p258 = scmp.eq.s32.totalorder %s18, 7
      %p259 = por %p257, %p258
      %p260 = scmp.ne.s32.totalorder %s252, %s255
      %p261 = scmp.eq.s32.totalorder %s18, 0
      %p262 = por %p260, %p261
      %p263 = scmp.ne.s32.totalorder %s252, %s255
      %p264 = scmp.eq.s32.totalorder %s23, 7
      %p265 = por %p263, %p264
      %p266 = scmp.ne.s32.totalorder %s255, %s256
      %p267 = scmp.eq.s32.totalorder %s23, 0
      %p268 = por %p266, %p267
      %p269 = scmp.ne.s32.totalorder %s255, %s256
      %p270 = scmp.eq.s32.totalorder %s24, 7
      %p271 = por %p269, %p270
      %p273 = scmp.ne.s32.totalorder %s256, %s272
      %p274 = scmp.eq.s32.totalorder %s24, 0
      %p275 = por %p273, %p274
      %p276 = scmp.le.s32.totalorder 1, %s18
      %p277 = scmp.lt.s32.totalorder %s18, 9
      %p278 = pnand %p276, %p277
      %p279 = pneg %p278
      // Predicated region
      $region9: #{tpu_custom_call.1} parent=5 // pred_check
        _
      $region10: #{tpu_custom_call.1} parent=5 // pred_check_branch
        %281 = sbr.rel (%p278) target = $region12
      $region11: #{tpu_custom_call.1} parent=5 // pred_region
        %s282 = ssub.s32 %s18, 1
        // Predicated region
        $region13: #{tpu_custom_call.1} parent=11 // pred_check
          %p283 = pneg %p135
        $region14: #{tpu_custom_call.1} parent=11 // pred_check_branch
          %285 = sbr.rel (%p283) target = $region16
        $region15: #{tpu_custom_call.1} parent=11 // pred_region
          _
        $region16: #{tpu_custom_call.1} parent=11 // pred_fallthru
          _
        // Predicated region
        $region17: #{tpu_custom_call.1} parent=11 // pred_check
          %p286 = pneg %p156
        $region18: #{tpu_custom_call.1} parent=11 // pred_check_branch
          %288 = sbr.rel (%p286) target = $region20
        $region19: #{tpu_custom_call.1} parent=11 // pred_region
          _
        $region20: #{tpu_custom_call.1} parent=11 // pred_fallthru
          _
        // Predicated region
        $region21: #{tpu_custom_call.1} parent=11 // pred_check
          %p289 = pneg %p177
        $region22: #{tpu_custom_call.1} parent=11 // pred_check_branch
          %291 = sbr.rel (%p289) target = $region24
        $region23: #{tpu_custom_call.1} parent=11 // pred_region
          _
        $region24: #{tpu_custom_call.1} parent=11 // pred_fallthru
          _
        // Predicated region
        $region25: #{tpu_custom_call.1} parent=11 // pred_check
          %p292 = pneg %p198
        $region26: #{tpu_custom_call.1} parent=11 // pred_check_branch
          %294 = sbr.rel (%p292) target = $region28
        $region27: #{tpu_custom_call.1} parent=11 // pred_region
          _
        $region28: #{tpu_custom_call.1} parent=11 // pred_fallthru
          _
        // Predicated region
        $region29: #{tpu_custom_call.1} parent=11 // pred_check
          %p295 = pneg %p219
        $region30: #{tpu_custom_call.1} parent=11 // pred_check_branch
          %297 = sbr.rel (%p295) target = $region32
        $region31: #{tpu_custom_call.1} parent=11 // pred_region
          _
        $region32: #{tpu_custom_call.1} parent=11 // pred_fallthru
          _
        // Predicated region
        $region33: #{tpu_custom_call.1} parent=11 // pred_check
          %p298 = pneg %p240
        $region34: #{tpu_custom_call.1} parent=11 // pred_check_branch
          %300 = sbr.rel (%p298) target = $region36
        $region35: #{tpu_custom_call.1} parent=11 // pred_region
          _
        $region36: #{tpu_custom_call.1} parent=11 // pred_fallthru
          _
      $region12: #{tpu_custom_call.1} parent=5 // pred_fallthru
        _
      %p301 = scmp.lt.s32.totalorder %s18, 8
      // Predicated region
      $region37: #{tpu_custom_call.1} parent=5 // pred_check
        %p302 = pneg %p301
      $region38: #{tpu_custom_call.1} parent=5 // pred_check_branch
        %304 = sbr.rel (%p302) target = $region40
      $region39: #{tpu_custom_call.1} parent=5 // pred_region
        // Predicated region
        $region41: #{tpu_custom_call.1} parent=39 // pred_check
          %p305 = pneg %p52
        $region42: #{tpu_custom_call.1} parent=39 // pred_check_branch
          %307 = sbr.rel (%p305) target = $region44
        $region43: #{tpu_custom_call.1} parent=39 // pred_region
          %s308 = smul.u32 4, %s26
          %p309 = scmp.lt.s32.totalorder %s25, 1
          %s310 = scalar_select %p309, %s25, 1
          %p311 = scmp.lt.s32.totalorder %s308, 15
          %s312 = scalar_select %p311, %s308, 15
          %s313 = smul.addr %s310, 16
          %s314 = sadd.s32 %s312, %s313
          %s315 = smul.addr %s314, 8
          %s316 = scalar_lea.vmem %s0, %s315
          %s317 = smul.u32 4, %s26
        $region44: #{tpu_custom_call.1} parent=39 // pred_fallthru
          _
        // Predicated region
        $region45: #{tpu_custom_call.1} parent=39 // pred_check
          %p318 = pneg %p80
        $region46: #{tpu_custom_call.1} parent=39 // pred_check_branch
          %320 = sbr.rel (%p318) target = $region48
        $region47: #{tpu_custom_call.1} parent=39 // pred_region
          %p321 = scmp.lt.s32.totalorder %s25, 1
          %s322 = scalar_select %p321, %s25, 1
          %p323 = scmp.lt.s32.totalorder %s26, 3
          %s324 = scalar_select %p323, %s26, 3
          %s325 = smul.addr %s322, 4
          %s326 = sadd.s32 %s324, %s325
          %s327 = smul.addr %s326, 8
          %s328 = scalar_lea.vmem %s1, %s327
        $region48: #{tpu_custom_call.1} parent=39 // pred_fallthru
          _
        // Predicated region
        $region49: #{tpu_custom_call.1} parent=39 // pred_check
          %p329 = pneg %p108
        $region50: #{tpu_custom_call.1} parent=39 // pred_check_branch
          %331 = sbr.rel (%p329) target = $region52
        $region51: #{tpu_custom_call.1} parent=39 // pred_region
          %p332 = scmp.lt.s32.totalorder %s25, 1
          %s333 = scalar_select %p332, %s25, 1
          %p334 = scmp.lt.s32.totalorder %s26, 3
          %s335 = scalar_select %p334, %s26, 3
          %s336 = smul.addr %s333, 4
          %s337 = sadd.s32 %s335, %s336
          %s338 = smul.addr %s337, 8
          %s339 = scalar_lea.vmem %s2, %s338
        $region52: #{tpu_custom_call.1} parent=39 // pred_fallthru
          _
      $region40: #{tpu_custom_call.1} parent=5 // pred_fallthru
        _
      %p340 = scmp.le.s32.totalorder 1, %s18
      %p341 = scmp.lt.s32.totalorder %s18, 9
      %p342 = pnand %p340, %p341
      %p343 = pneg %p342
      // Predicated region
      $region53: #{tpu_custom_call.1} parent=5 // pred_check
        _
      $region54: #{tpu_custom_call.1} parent=5 // pred_check_branch
        %345 = sbr.rel (%p342) target = $region56
      $region55: #{tpu_custom_call.1} parent=5 // pred_region
        %s346 = ssub.s32 %s18, 1
        %s347 = smul.u32 4, %s28
        %p348 = scmp.lt.s32.totalorder %s27, 1
        %s349 = scalar_select %p348, %s27, 1
        %p350 = scmp.lt.s32.totalorder %s347, 15
        %s351 = scalar_select %p350, %s347, 15
        %s352 = smul.addr %s349, 16
        %s353 = sadd.s32 %s351, %s352
        %s354 = smul.addr %s353, 8
        %s355 = scalar_lea.vmem %s0, %s354
        %p356 = pneg %p58
        %p357 = pneg %p55
        %p358 = scmp.lt.s32.totalorder %s27, 1
        %s359 = scalar_select %p358, %s27, 1
        %p360 = scmp.lt.s32.totalorder %s28, 3
        %s361 = scalar_select %p360, %s28, 3
        %s362 = smul.addr %s359, 4
        %s363 = sadd.s32 %s361, %s362
        %s364 = smul.addr %s363, 8
        %s365 = scalar_lea.vmem %s1, %s364
        %p366 = pneg %p86
        %p367 = pneg %p83
        %p368 = scmp.lt.s32.totalorder %s27, 1
        %s369 = scalar_select %p368, %s27, 1
        %p370 = scmp.lt.s32.totalorder %s28, 3
        %s371 = scalar_select %p370, %s28, 3
        %s372 = smul.addr %s369, 4
        %s373 = sadd.s32 %s371, %s372
        %s374 = smul.addr %s373, 8
        %s375 = scalar_lea.vmem %s2, %s374
        %p376 = pneg %p114
        %p377 = pneg %p111
        %p378 = pneg %p135
        %p379 = pneg %p132
        %p380 = pneg %p156
        %p381 = pneg %p153
        %p382 = pneg %p177
        %p383 = pneg %p174
        %p384 = pneg %p198
        %p385 = pneg %p195
        %p386 = pneg %p219
        %p387 = pneg %p216
        %p388 = pneg %p240
        %p389 = pneg %p237
        %p390 = pneg %p268
        %p391 = pneg %p265
        %s392 = sand.u32 %s255, 1
        %s393 = scalar_lea.sflag [#allocation3], %s392
        %s394 = sand.u32 %s255, 1
        %s395 = smul.addr %s394, 32
        %s396 = scalar_lea.vmem [#allocation2], %s395
        %s397 = smul.u32 4, %s28
        %p398 = scmp.lt.s32.totalorder %s27, 1
        %s399 = scalar_select %p398, %s27, 1
        %p400 = scmp.lt.s32.totalorder %s397, 15
        %s401 = scalar_select %p400, %s397, 15
        %s402 = smul.addr %s399, 16
        %s403 = sadd.s32 %s401, %s402
        %s404 = smul.addr %s403, 8
        %s405 = scalar_lea.vmem %s0, %s404
        %s406 = smul.u32 4, %s28
        %p407 = scmp.lt.s32.totalorder %s27, 1
        %s408 = scalar_select %p407, %s27, 1
        %p409 = scmp.lt.s32.totalorder %s28, 3
        %s410 = scalar_select %p409, %s28, 3
        %s411 = smul.addr %s408, 4
        %s412 = sadd.s32 %s410, %s411
        %s413 = smul.addr %s412, 8
        %s414 = scalar_lea.vmem %s1, %s413
        %p415 = scmp.lt.s32.totalorder %s27, 1
        %s416 = scalar_select %p415, %s27, 1
        %p417 = scmp.lt.s32.totalorder %s28, 3
        %s418 = scalar_select %p417, %s28, 3
        %s419 = smul.addr %s416, 4
        %s420 = sadd.s32 %s418, %s419
        %s421 = smul.addr %s420, 8
        %s422 = scalar_lea.vmem %s2, %s421
        %s423 = smul.u32 4, %s28
        %v424 = vld [vmem:[%s414] sm:$0xff]
        %v425 = vld [vmem:[%s405] sm:$0xff]
        %v426 = vld [vmem:[%s405 + $0x8] sm:$0xff]
        %v427 = vld [vmem:[%s405 + $0x10] sm:$0xff]
        %v428 = vld [vmem:[%s405 + $0x18] sm:$0xff]
        %v429 = vld [vmem:[%s422] sm:$0xff]
        %v430 = vld [vmem:[%s3] sm:$0xff]
        %v431 = vld [vmem:[%s3 + $0x8] sm:$0xff]
        %v432 = vld [vmem:[%s3 + $0x10] sm:$0xff]
        %v433 = vld [vmem:[%s3 + $0x18] sm:$0xff]
        %v434 = vld [vmem:[%s4] sm:$0xff]
        %v435 = vld [vmem:[%s4 + $0x8] sm:$0xff]
        %v436 = vld [vmem:[%s4 + $0x10] sm:$0xff]
        %v437 = vld [vmem:[%s4 + $0x18] sm:$0xff]
        %439 = vset.pattern.permute.xlu0 0
        %440 = vperm.xlu0 %439, %v434
        %v441 = vpop.permute.xlu0 %440
        %444 = vset.pattern.permute.xlu0 0
        %445 = vperm.xlu0 %444, %v435
        %v446 = vpop.permute.xlu0 %445
        %449 = vset.pattern.permute.xlu0 0
        %450 = vperm.xlu0 %449, %v436
        %v451 = vpop.permute.xlu0 %450
        %454 = vset.pattern.permute.xlu0 0
        %455 = vperm.xlu0 %454, %v437
        %v456 = vpop.permute.xlu0 %455
        %vm458 = vcmask 64512
        %v460 = vsel %vm458, %v430, 0
        %v463 = vsel %vm458, %v431, 0
        %v466 = vsel %vm458, %v432, 0
        %v469 = vsel %vm458, %v433, 0
        %471 = vmatprep.subr.mxu0 %v425
        %472 = vmatpush1.msra.mxu0 %v424
        %473 = vmatprep.subr.mxu0 0.0
        %474 = vmatpush1.msra.mxu0 0.0
        %475 = vmatprep.subr.mxu0 0.0
        %476 = vmatpush1.msra.mxu0 0.0
        %477 = vmatprep.subr.mxu0 0.0
        %478 = vmatpush1.msra.mxu0 0.0
        %479 = vmatprep.subr.mxu0 0.0
        %480 = vmatpush1.msra.mxu0 0.0
        %481 = vmatprep.subr.mxu0 0.0
        %482 = vmatpush1.msra.mxu0 0.0
        %483 = vmatprep.subr.mxu0 0.0
        %484 = vmatpush1.msra.mxu0 0.0
        %485 = vmatprep.subr.mxu0 0.0
        %486 = vmatpush1.msra.mxu0 0.0
        %487 = vmatprep.subr.mxu0 0.0
        %488 = vmatpush1.msra.mxu0 0.0
        %489 = vmatprep.subr.mxu0 0.0
        %490 = vmatpush1.msra.mxu0 0.0
        %491 = vmatprep.subr.mxu0 0.0
        %492 = vmatpush1.msra.mxu0 0.0
        %493 = vmatprep.subr.mxu0 0.0
        %494 = vmatpush1.msra.mxu0 0.0
        %495 = vmatprep.subr.mxu0 0.0
        %496 = vmatpush1.msra.mxu0 0.0
        %497 = vmatprep.subr.mxu0 0.0
        %498 = vmatpush1.msra.mxu0 0.0
        %499 = vmatprep.subr.mxu0 0.0
        %500 = vmatpush1.msra.mxu0 0.0
        %501 = vmatprep.subr.mxu0 0.0
        %502 = vmatpush1.msra.mxu0 0.0
        %503 = vmatprep.subr.mxu0 0.0
        %504 = vmatpush1.msra.mxu0 0.0
        %505 = vmatprep.subr.mxu0 0.0
        %506 = vmatpush1.msra.mxu0 0.0
        %507 = vmatprep.subr.mxu0 0.0
        %508 = vmatpush1.msra.mxu0 0.0
        %509 = vmatprep.subr.mxu0 0.0
        %510 = vmatpush1.msra.mxu0 0.0
        %511 = vmatprep.subr.mxu0 0.0
        %512 = vmatpush1.msra.mxu0 0.0
        %513 = vmatprep.subr.mxu0 0.0
        %514 = vmatpush1.msra.mxu0 0.0
        %515 = vmatprep.subr.mxu0 0.0
        %516 = vmatpush1.msra.mxu0 0.0
        %517 = vmatprep.subr.mxu0 0.0
        %518 = vmatpush1.msra.mxu0 0.0
        %519 = vmatprep.subr.mxu0 0.0
        %520 = vmatpush1.msra.mxu0 0.0
        %521 = vmatprep.subr.mxu0 0.0
        %522 = vmatpush1.msra.mxu0 0.0
        %523 = vmatprep.subr.mxu0 0.0
        %524 = vmatpush1.msra.mxu0 0.0
        %525 = vmatprep.subr.mxu0 0.0
        %526 = vmatpush1.msra.mxu0 0.0
        %527 = vmatprep.subr.mxu0 0.0
        %528 = vmatpush1.msra.mxu0 0.0
        %529 = vmatprep.subr.mxu0 0.0
        %530 = vmatpush1.msra.mxu0 0.0
        %531 = vmatprep.subr.mxu0 0.0
        %532 = vmatpush1.msra.mxu0 0.0
        %533 = vmatprep.subr.mxu0 0.0
        %534 = vmatpush1.msra.mxu0 0.0
        %535 = vmatprep.mubr.f32.mxu0 0.0
        %536 = vmatmul.mubr.f32.gmra.mrb[0].mxu0 %v460
        %v537 = vpop.f32.mrb[0].mxu0
        %v538 = vadd.f32 %v441, %v537
        %v539 = vpop.f32.mrb[0].mxu0
        %v540 = vadd.f32 %v441, %v539
        %541 = vmatprep.mubr.f32.mxu0 0.0
        %542 = vmatmul.mubr.f32.gmra.mrb[0].mxu0 %v463
        %v543 = vpop.f32.mrb[0].mxu0
        %v544 = vadd.f32 %v446, %v543
        %v545 = vpop.f32.mrb[0].mxu0
        %v546 = vadd.f32 %v446, %v545
        %547 = vmatprep.mubr.f32.mxu0 0.0
        %548 = vmatmul.mubr.f32.gmra.mrb[0].mxu0 %v466
        %v549 = vpop.f32.mrb[0].mxu0
        %v550 = vadd.f32 %v451, %v549
        %v551 = vpop.f32.mrb[0].mxu0
        %v552 = vadd.f32 %v451, %v551
        %553 = vmatprep.mubr.f32.mxu0 0.0
        %554 = vmatmul.mubr.f32.gmra.mrb[0].mxu0 %v469
        %v555 = vpop.f32.mrb[0].mxu0
        %v556 = vadd.f32 %v456, %v555
        %v557 = vpop.f32.mrb[0].mxu0
        %v558 = vadd.f32 %v456, %v557
        %559 = vdwg.mxu0
        %560 = vmatprep.subr.mxu0 %v427
        %561 = vmatpush1.msra.mxu0 %v426
        %562 = vmatprep.subr.mxu0 0.0
        %563 = vmatpush1.msra.mxu0 0.0
        %564 = vmatprep.subr.mxu0 0.0
        %565 = vmatpush1.msra.mxu0 0.0
        %566 = vmatprep.subr.mxu0 0.0
        %567 = vmatpush1.msra.mxu0 0.0
        %568 = vmatprep.subr.mxu0 0.0
        %569 = vmatpush1.msra.mxu0 0.0
        %570 = vmatprep.subr.mxu0 0.0
        %571 = vmatpush1.msra.mxu0 0.0
        %572 = vmatprep.subr.mxu0 0.0
        %573 = vmatpush1.msra.mxu0 0.0
        %574 = vmatprep.subr.mxu0 0.0
        %575 = vmatpush1.msra.mxu0 0.0
        %576 = vmatprep.subr.mxu0 0.0
        %577 = vmatpush1.msra.mxu0 0.0
        %578 = vmatprep.subr.mxu0 0.0
        %579 = vmatpush1.msra.mxu0 0.0
        %580 = vmatprep.subr.mxu0 0.0
        %581 = vmatpush1.msra.mxu0 0.0
        %582 = vmatprep.subr.mxu0 0.0
        %583 = vmatpush1.msra.mxu0 0.0
        %584 = vmatprep.subr.mxu0 0.0
        %585 = vmatpush1.msra.mxu0 0.0
        %586 = vmatprep.subr.mxu0 0.0
        %587 = vmatpush1.msra.mxu0 0.0
        %588 = vmatprep.subr.mxu0 0.0
        %589 = vmatpush1.msra.mxu0 0.0
        %590 = vmatprep.subr.mxu0 0.0
        %591 = vmatpush1.msra.mxu0 0.0
        %592 = vmatprep.subr.mxu0 0.0
        %593 = vmatpush1.msra.mxu0 0.0
        %594 = vmatprep.subr.mxu0 0.0
        %595 = vmatpush1.msra.mxu0 0.0
        %596 = vmatprep.subr.mxu0 0.0
        %597 = vmatpush1.msra.mxu0 0.0
        %598 = vmatprep.subr.mxu0 0.0
        %599 = vmatpush1.msra.mxu0 0.0
        %600 = vmatprep.subr.mxu0 0.0
        %601 = vmatpush1.msra.mxu0 0.0
        %602 = vmatprep.subr.mxu0 0.0
        %603 = vmatpush1.msra.mxu0 0.0
        %604 = vmatprep.subr.mxu0 0.0
        %605 = vmatpush1.msra.mxu0 0.0
        %606 = vmatprep.subr.mxu0 0.0
        %607 = vmatpush1.msra.mxu0 0.0
        %608 = vmatprep.subr.mxu0 0.0
        %609 = vmatpush1.msra.mxu0 0.0
        %610 = vmatprep.subr.mxu0 0.0
        %611 = vmatpush1.msra.mxu0 0.0
        %612 = vmatprep.subr.mxu0 0.0
        %613 = vmatpush1.msra.mxu0 0.0
        %614 = vmatprep.subr.mxu0 0.0
        %615 = vmatpush1.msra.mxu0 0.0
        %616 = vmatprep.subr.mxu0 0.0
        %617 = vmatpush1.msra.mxu0 0.0
        %618 = vmatprep.subr.mxu0 0.0
        %619 = vmatpush1.msra.mxu0 0.0
        %620 = vmatprep.subr.mxu0 0.0
        %621 = vmatpush1.msra.mxu0 0.0
        %622 = vmatprep.subr.mxu0 0.0
        %623 = vmatpush1.msra.mxu0 0.0
        %624 = vmatprep.mubr.f32.mxu0 0.0
        %625 = vmatmul.mubr.f32.gmra.mrb[0].mxu0 %v460
        %v626 = vpop.f32.mrb[0].mxu0
        %v627 = vadd.f32 %v441, %v626
        %v628 = vpop.f32.mrb[0].mxu0
        %v629 = vadd.f32 %v441, %v628
        %630 = vmatprep.mubr.f32.mxu0 0.0
        %631 = vmatmul.mubr.f32.gmra.mrb[0].mxu0 %v463
        %v632 = vpop.f32.mrb[0].mxu0
        %v633 = vadd.f32 %v446, %v632
        %v634 = vpop.f32.mrb[0].mxu0
        %v635 = vadd.f32 %v446, %v634
        %636 = vmatprep.mubr.f32.mxu0 0.0
        %637 = vmatmul.mubr.f32.gmra.mrb[0].mxu0 %v466
        %v638 = vpop.f32.mrb[0].mxu0
        %v639 = vadd.f32 %v451, %v638
        %v640 = vpop.f32.mrb[0].mxu0
        %v641 = vadd.f32 %v451, %v640
        %642 = vmatprep.mubr.f32.mxu0 0.0
        %643 = vmatmul.mubr.f32.gmra.mrb[0].mxu0 %v469
        %v644 = vpop.f32.mrb[0].mxu0
        %v645 = vadd.f32 %v456, %v644
        %v646 = vpop.f32.mrb[0].mxu0
        %v647 = vadd.f32 %v456, %v646
        %648 = vdwg.mxu0
        %649 = vmatprep.subr.mxu0 %v429
        %650 = vmatpush1.msra.mxu0 %v428
        %651 = vmatprep.subr.mxu0 0.0
        %652 = vmatpush1.msra.mxu0 0.0
        %653 = vmatprep.subr.mxu0 0.0
        %654 = vmatpush1.msra.mxu0 0.0
        %655 = vmatprep.subr.mxu0 0.0
        %656 = vmatpush1.msra.mxu0 0.0
        %657 = vmatprep.subr.mxu0 0.0
        %658 = vmatpush1.msra.mxu0 0.0
        %659 = vmatprep.subr.mxu0 0.0
        %660 = vmatpush1.msra.mxu0 0.0
        %661 = vmatprep.subr.mxu0 0.0
        %662 = vmatpush1.msra.mxu0 0.0
        %663 = vmatprep.subr.mxu0 0.0
        %664 = vmatpush1.msra.mxu0 0.0
        %665 = vmatprep.subr.mxu0 0.0
        %666 = vmatpush1.msra.mxu0 0.0
        %667 = vmatprep.subr.mxu0 0.0
        %668 = vmatpush1.msra.mxu0 0.0
        %669 = vmatprep.subr.mxu0 0.0
        %670 = vmatpush1.msra.mxu0 0.0
        %671 = vmatprep.subr.mxu0 0.0
        %672 = vmatpush1.msra.mxu0 0.0
        %673 = vmatprep.subr.mxu0 0.0
        %674 = vmatpush1.msra.mxu0 0.0
        %675 = vmatprep.subr.mxu0 0.0
        %676 = vmatpush1.msra.mxu0 0.0
        %677 = vmatprep.subr.mxu0 0.0
        %678 = vmatpush1.msra.mxu0 0.0
        %679 = vmatprep.subr.mxu0 0.0
        %680 = vmatpush1.msra.mxu0 0.0
        %681 = vmatprep.subr.mxu0 0.0
        %682 = vmatpush1.msra.mxu0 0.0
        %683 = vmatprep.subr.mxu0 0.0
        %684 = vmatpush1.msra.mxu0 0.0
        %685 = vmatprep.subr.mxu0 0.0
        %686 = vmatpush1.msra.mxu0 0.0
        %687 = vmatprep.subr.mxu0 0.0
        %688 = vmatpush1.msra.mxu0 0.0
        %689 = vmatprep.subr.mxu0 0.0
        %690 = vmatpush1.msra.mxu0 0.0
        %691 = vmatprep.subr.mxu0 0.0
        %692 = vmatpush1.msra.mxu0 0.0
        %693 = vmatprep.subr.mxu0 0.0
        %694 = vmatpush1.msra.mxu0 0.0
        %695 = vmatprep.subr.mxu0 0.0
        %696 = vmatpush1.msra.mxu0 0.0
        %697 = vmatprep.subr.mxu0 0.0
        %698 = vmatpush1.msra.mxu0 0.0
        %699 = vmatprep.subr.mxu0 0.0
        %700 = vmatpush1.msra.mxu0 0.0
        %701 = vmatprep.subr.mxu0 0.0
        %702 = vmatpush1.msra.mxu0 0.0
        %703 = vmatprep.subr.mxu0 0.0
        %704 = vmatpush1.msra.mxu0 0.0
        %705 = vmatprep.subr.mxu0 0.0
        %706 = vmatpush1.msra.mxu0 0.0
        %707 = vmatprep.subr.mxu0 0.0
        %708 = vmatpush1.msra.mxu0 0.0
        %709 = vmatprep.subr.mxu0 0.0
        %710 = vmatpush1.msra.mxu0 0.0
        %711 = vmatprep.subr.mxu0 0.0
        %712 = vmatpush1.msra.mxu0 0.0
        %713 = vmatprep.mubr.f32.mxu0 0.0
        %714 = vmatmul.mubr.f32.gmra.mrb[0].mxu0 %v460
        %v715 = vpop.f32.mrb[0].mxu0
        %v716 = vadd.f32 %v441, %v715
        %v717 = vpop.f32.mrb[0].mxu0
        %v718 = vadd.f32 %v441, %v717
        %719 = vmatprep.mubr.f32.mxu0 0.0
        %720 = vmatmul.mubr.f32.gmra.mrb[0].mxu0 %v463
        %v721 = vpop.f32.mrb[0].mxu0
        %v722 = vadd.f32 %v446, %v721
        %v723 = vpop.f32.mrb[0].mxu0
        %v724 = vadd.f32 %v446, %v723
        %725 = vmatprep.mubr.f32.mxu0 0.0
        %726 = vmatmul.mubr.f32.gmra.mrb[0].mxu0 %v466
        %v727 = vpop.f32.mrb[0].mxu0
        %v728 = vadd.f32 %v451, %v727
        %v729 = vpop.f32.mrb[0].mxu0
        %v730 = vadd.f32 %v451, %v729
        %731 = vmatprep.mubr.f32.mxu0 0.0
        %732 = vmatmul.mubr.f32.gmra.mrb[0].mxu0 %v469
        %v733 = vpop.f32.mrb[0].mxu0
        %v734 = vadd.f32 %v456, %v733
        %v735 = vpop.f32.mrb[0].mxu0
        %v736 = vadd.f32 %v456, %v735
        %737 = vdwg.mxu0
        %v738 = vlaneseq
        %v739 = vand.u32 %v738, 127
        %v740 = vadd.s32 %v739, 128
        %v741 = vadd.s32 %v739, 256
        %v742 = vadd.s32 %v739, 384
        %v743 = vadd.s32 %v739, 512
        %v744 = vadd.s32 %v739, 640
        %vm745 = vcmp.lt.s32.totalorder %v739, 0
        %v746 = vsub.s32 0, %v739
        %v747 = vsel %vm745, %v746, %v739
        %v748 = vshrl.u32 %v747, 7
        %v749 = vand.u32 %v747, 127
        %v750 = vsub.s32 0, %v749
        %v751 = vsel %vm745, %v750, %v749
        %vm752 = vcmp.lt.s32.totalorder %v740, 0
        %v753 = vsub.s32 0, %v740
        %v754 = vsel %vm752, %v753, %v740
        %v755 = vshrl.u32 %v754, 7
        %v756 = vand.u32 %v754, 127
        %v757 = vsub.s32 0, %v756
        %v758 = vsel %vm752, %v757, %v756
        %vm759 = vcmp.lt.s32.totalorder %v741, 0
        %v760 = vsub.s32 0, %v741
        %v761 = vsel %vm759, %v760, %v741
        %v762 = vshrl.u32 %v761, 7
        %v763 = vand.u32 %v761, 127
        %v764 = vsub.s32 0, %v763
        %v765 = vsel %vm759, %v764, %v763
        %vm766 = vcmp.lt.s32.totalorder %v742, 0
        %v767 = vsub.s32 0, %v742
        %v768 = vsel %vm766, %v767, %v742
        %v769 = vshrl.u32 %v768, 7
        %v770 = vand.u32 %v768, 127
        %v771 = vsub.s32 0, %v770
        %v772 = vsel %vm766, %v771, %v770
        %vm773 = vcmp.lt.s32.totalorder %v743, 0
        %v774 = vsub.s32 0, %v743
        %v775 = vsel %vm773, %v774, %v743
        %v776 = vshrl.u32 %v775, 7
        %v777 = vand.u32 %v775, 127
        %v778 = vsub.s32 0, %v777
        %v779 = vsel %vm773, %v778, %v777
        %vm780 = vcmp.lt.s32.totalorder %v744, 0
        %v781 = vsub.s32 0, %v744
        %v782 = vsel %vm780, %v781, %v744
        %v783 = vshrl.u32 %v782, 7
        %v784 = vand.u32 %v782, 127
        %v785 = vsub.s32 0, %v784
        %v786 = vsel %vm780, %v785, %v784
        %vm787 = vcmp.ne.s32.totalorder %v751, 0
        %vm788 = vcmp.ne.s32.totalorder %v758, 0
        %vm789 = vcmp.ne.s32.totalorder %v765, 0
        %vm790 = vcmp.ne.s32.totalorder %v772, 0
        %vm791 = vcmp.ne.s32.totalorder %v779, 0
        %vm792 = vcmp.ne.s32.totalorder %v786, 0
        %vm793 = vcmp.lt.s32.totalorder %v751, 0
        %vm794 = vcmp.lt.s32.totalorder %v758, 0
        %vm795 = vcmp.lt.s32.totalorder %v765, 0
        %vm796 = vcmp.lt.s32.totalorder %v772, 0
        %vm797 = vcmp.lt.s32.totalorder %v779, 0
        %vm798 = vcmp.lt.s32.totalorder %v786, 0
        %vm799 = vmand %vm793, %vm787
        %vm800 = vmand %vm794, %vm788
        %vm801 = vmand %vm795, %vm789
        %vm802 = vmand %vm796, %vm790
        %vm803 = vmand %vm797, %vm791
        %vm804 = vmand %vm798, %vm792
        %v805 = vadd.s32 %v751, 128
        %v806 = vadd.s32 %v758, 128
        %v807 = vadd.s32 %v765, 128
        %v808 = vadd.s32 %v772, 128
        %v809 = vadd.s32 %v779, 128
        %v810 = vadd.s32 %v786, 128
        %v811 = vsel %vm799, %v805, %v751
        %v812 = vsel %vm800, %v806, %v758
        %v813 = vsel %vm801, %v807, %v765
        %v814 = vsel %vm802, %v808, %v772
        %v815 = vsel %vm803, %v809, %v779
        %v816 = vsel %vm804, %v810, %v786
        %vm817 = vcmp.lt.s32.totalorder %v739, 128
        %vm818 = vcmp.lt.s32.totalorder %v740, 128
        %vm819 = vcmp.lt.s32.totalorder %v741, 128
        %vm820 = vcmp.lt.s32.totalorder %v742, 128
        %vm821 = vcmp.lt.s32.totalorder %v743, 128
        %vm822 = vcmp.lt.s32.totalorder %v744, 128
        %p823 = scmp.eq.s32.totalorder %s28, 0
        %s824 = scalar_select %p823, 1, 0
        %v825 = vstv %s824
        %vm826 = vcmp.eq.s32.totalorder %v825, 1
        %vm827 = vmand %vm817, %vm826
        %vm828 = vmand %vm818, %vm826
        %vm829 = vmand %vm819, %vm826
        %vm830 = vmand %vm820, %vm826
        %vm831 = vmand %vm821, %vm826
        %vm832 = vmand %vm822, %vm826
        %vm833 = vcmp.ge.s32.totalorder %v739, 640
        %vm834 = vcmp.ge.s32.totalorder %v740, 640
        %vm835 = vcmp.ge.s32.totalorder %v741, 640
        %vm836 = vcmp.ge.s32.totalorder %v742, 640
        %vm837 = vcmp.ge.s32.totalorder %v743, 640
        %vm838 = vcmp.ge.s32.totalorder %v744, 640
        %p839 = scmp.eq.s32.totalorder %s28, 3
        %s840 = scalar_select %p839, 1, 0
        %v841 = vstv %s840
        %vm842 = vcmp.eq.s32.totalorder %v841, 1
        %vm843 = vmand %vm833, %vm842
        %vm844 = vmand %vm834, %vm842
        %vm845 = vmand %vm835, %vm842
        %vm846 = vmand %vm836, %vm842
        %vm847 = vmand %vm837, %vm842
        %vm848 = vmand %vm838, %vm842
        %vm849 = vmor %vm827, %vm843
        %vm850 = vmor %vm828, %vm844
        %vm851 = vmor %vm829, %vm845
        %vm852 = vmor %vm830, %vm846
        %vm853 = vmor %vm831, %vm847
        %vm854 = vmor %vm832, %vm848
        %vm855 = vmxor %vm849, 1
        %vm856 = vmxor %vm850, 1
        %vm857 = vmxor %vm851, 1
        %vm858 = vmxor %vm852, 1
        %vm859 = vmxor %vm853, 1
        %vm860 = vmxor %vm854, 1
        %v861 = vsel %vm855, 1, 0
        %v862 = vsel %vm856, 1, 0
        %v863 = vsel %vm857, 1, 0
        %v864 = vsel %vm858, 1, 0
        %v865 = vsel %vm859, 1, 0
        %v866 = vsel %vm860, 1, 0
        %vm867 = vcmp.eq.s32.totalorder %v861, 1
        %vm868 = vcmp.eq.s32.totalorder %v862, 1
        %vm869 = vcmp.eq.s32.totalorder %v863, 1
        %vm870 = vcmp.eq.s32.totalorder %v864, 1
        %vm871 = vcmp.eq.s32.totalorder %v865, 1
        %vm872 = vcmp.eq.s32.totalorder %v866, 1
        %v873 = vsel %vm867, %v538, 0.0
        %v874 = vsel %vm868, %v540, 0.0
        %v875 = vsel %vm869, %v627, 0.0
        %v876 = vsel %vm870, %v629, 0.0
        %v877 = vsel %vm871, %v716, 0.0
        %v878 = vsel %vm872, %v718, 0.0
        %v879 = vsel %vm867, %v544, 0.0
        %v880 = vsel %vm868, %v546, 0.0
        %v881 = vsel %vm869, %v633, 0.0
        %v882 = vsel %vm870, %v635, 0.0
        %v883 = vsel %vm871, %v722, 0.0
        %v884 = vsel %vm872, %v724, 0.0
        %v885 = vsel %vm867, %v550, 0.0
        %v886 = vsel %vm868, %v552, 0.0
        %v887 = vsel %vm869, %v639, 0.0
        %v888 = vsel %vm870, %v641, 0.0
        %v889 = vsel %vm871, %v728, 0.0
        %v890 = vsel %vm872, %v730, 0.0
        %v891 = vsel %vm867, %v556, 0.0
        %v892 = vsel %vm868, %v558, 0.0
        %v893 = vsel %vm869, %v645, 0.0
        %v894 = vsel %vm870, %v647, 0.0
        %v895 = vsel %vm871, %v734, 0.0
        %v896 = vsel %vm872, %v736, 0.0
        %vm897 = vcmp.lt.s32.totalorder %v811, 127
        %vm898 = vcmp.lt.s32.totalorder %v812, 127
        %vm899 = vcmp.lt.s32.totalorder %v813, 127
        %vm900 = vcmp.lt.s32.totalorder %v814, 127
        %vm901 = vcmp.lt.s32.totalorder %v815, 127
        %vm902 = vcmp.lt.s32.totalorder %v816, 127
        %v903 = vsel %vm897, 1, 0
        %v904 = vsel %vm898, 1, 0
        %v905 = vsel %vm899, 1, 0
        %v906 = vsel %vm900, 1, 0
        %v907 = vsel %vm901, 1, 0
        %v908 = vsel %vm902, 1, 0
        %vm909 = vcmp.eq.s32.totalorder %v903, 1
        %vm910 = vcmp.eq.s32.totalorder %v904, 1
        %vm911 = vcmp.eq.s32.totalorder %v905, 1
        %vm912 = vcmp.eq.s32.totalorder %v906, 1
        %vm913 = vcmp.eq.s32.totalorder %v907, 1
        %vm914 = vcmp.eq.s32.totalorder %v908, 1
        %v915 = vsel %vm909, %v873, 0.0
        %v916 = vsel %vm910, %v874, 0.0
        %v917 = vsel %vm911, %v875, 0.0
        %v918 = vsel %vm912, %v876, 0.0
        %v919 = vsel %vm913, %v877, 0.0
        %v920 = vsel %vm914, %v878, 0.0
        %v921 = vsel %vm909, %v879, 0.0
        %v922 = vsel %vm910, %v880, 0.0
        %v923 = vsel %vm911, %v881, 0.0
        %v924 = vsel %vm912, %v882, 0.0
        %v925 = vsel %vm913, %v883, 0.0
        %v926 = vsel %vm914, %v884, 0.0
        %v927 = vsel %vm909, %v885, 0.0
        %v928 = vsel %vm910, %v886, 0.0
        %v929 = vsel %vm911, %v887, 0.0
        %v930 = vsel %vm912, %v888, 0.0
        %v931 = vsel %vm913, %v889, 0.0
        %v932 = vsel %vm914, %v890, 0.0
        %v933 = vsel %vm909, %v891, 0.0
        %v934 = vsel %vm910, %v892, 0.0
        %v935 = vsel %vm911, %v893, 0.0
        %v936 = vsel %vm912, %v894, 0.0
        %v937 = vsel %vm913, %v895, 0.0
        %v938 = vsel %vm914, %v896, 0.0
        %vm939 = vcmp.ge.s32.totalorder %v811, 1
        %vm940 = vcmp.ge.s32.totalorder %v812, 1
        %vm941 = vcmp.ge.s32.totalorder %v813, 1
        %vm942 = vcmp.ge.s32.totalorder %v814, 1
        %vm943 = vcmp.ge.s32.totalorder %v815, 1
        %vm944 = vcmp.ge.s32.totalorder %v816, 1
        %v945 = vsel %vm939, 1, 0
        %v946 = vsel %vm940, 1, 0
        %v947 = vsel %vm941, 1, 0
        %v948 = vsel %vm942, 1, 0
        %v949 = vsel %vm943, 1, 0
        %v950 = vsel %vm944, 1, 0
        %vm951 = vcmp.eq.s32.totalorder %v945, 1
        %vm952 = vcmp.eq.s32.totalorder %v946, 1
        %vm953 = vcmp.eq.s32.totalorder %v947, 1
        %vm954 = vcmp.eq.s32.totalorder %v948, 1
        %vm955 = vcmp.eq.s32.totalorder %v949, 1
        %vm956 = vcmp.eq.s32.totalorder %v950, 1
        %v957 = vsel %vm951, %v873, 0.0
        %v958 = vsel %vm952, %v874, 0.0
        %v959 = vsel %vm953, %v875, 0.0
        %v960 = vsel %vm954, %v876, 0.0
        %v961 = vsel %vm955, %v877, 0.0
        %v962 = vsel %vm956, %v878, 0.0
        %v963 = vsel %vm951, %v879, 0.0
        %v964 = vsel %vm952, %v880, 0.0
        %v965 = vsel %vm953, %v881, 0.0
        %v966 = vsel %vm954, %v882, 0.0
        %v967 = vsel %vm955, %v883, 0.0
        %v968 = vsel %vm956, %v884, 0.0
        %v969 = vsel %vm951, %v885, 0.0
        %v970 = vsel %vm952, %v886, 0.0
        %v971 = vsel %vm953, %v887, 0.0
        %v972 = vsel %vm954, %v888, 0.0
        %v973 = vsel %vm955, %v889, 0.0
        %v974 = vsel %vm956, %v890, 0.0
        %v975 = vsel %vm951, %v891, 0.0
        %v976 = vsel %vm952, %v892, 0.0
        %v977 = vsel %vm953, %v893, 0.0
        %v978 = vsel %vm954, %v894, 0.0
        %v979 = vsel %vm955, %v895, 0.0
        %v980 = vsel %vm956, %v896, 0.0
        %v981 = vld [vmem:[%s5] sm:$0xff]
        %v982 = vld [vmem:[%s5 + $0x8] sm:$0xff]
        %v983 = vld [vmem:[%s5 + $0x10] sm:$0xff]
        %v984 = vld [vmem:[%s5 + $0x18] sm:$0xff]
        %v985 = vld [vmem:[%s5 + $0x20] sm:$0xff]
        %v986 = vld [vmem:[%s5 + $0x28] sm:$0xff]
        %v987 = vld [vmem:[%s5 + $0x30] sm:$0xff]
        %v988 = vld [vmem:[%s5 + $0x38] sm:$0xff]
        %v989 = vld [vmem:[%s5 + $0x40] sm:$0xff]
        %v990 = vld [vmem:[%s5 + $0x48] sm:$0xff]
        %v991 = vld [vmem:[%s5 + $0x50] sm:$0xff]
        %v992 = vld [vmem:[%s5 + $0x58] sm:$0xff]
        %v993 = vld [vmem:[%s5 + $0x60] sm:$0xff]
        %v994 = vld [vmem:[%s5 + $0x68] sm:$0xff]
        %v995 = vld [vmem:[%s5 + $0x70] sm:$0xff]
        %v996 = vld [vmem:[%s5 + $0x78] sm:$0xff]
        %v997 = vld [vmem:[%s5 + $0x80] sm:$0xff]
        %v998 = vld [vmem:[%s5 + $0x88] sm:$0xff]
        %v999 = vld [vmem:[%s5 + $0x90] sm:$0xff]
        %v1000 = vld [vmem:[%s5 + $0x98] sm:$0xff]
        %v1001 = vld [vmem:[%s5 + $0xa0] sm:$0xff]
        %v1002 = vld [vmem:[%s5 + $0xa8] sm:$0xff]
        %v1003 = vld [vmem:[%s5 + $0xb0] sm:$0xff]
        %v1004 = vld [vmem:[%s5 + $0xb8] sm:$0xff]
        %v1005 = vld [vmem:[%s5 + $0xc0] sm:$0xff]
        %v1006 = vld [vmem:[%s5 + $0xc8] sm:$0xff]
        %v1007 = vld [vmem:[%s5 + $0xd0] sm:$0xff]
        %v1008 = vld [vmem:[%s5 + $0xd8] sm:$0xff]
        %v1009 = vld [vmem:[%s5 + $0xe0] sm:$0xff]
        %v1010 = vld [vmem:[%s5 + $0xe8] sm:$0xff]
        %v1011 = vld [vmem:[%s5 + $0xf0] sm:$0xff]
        %v1012 = vld [vmem:[%s5 + $0xf8] sm:$0xff]
        %v1013 = vld [vmem:[%s5 + $0x100] sm:$0xff]
        %v1014 = vld [vmem:[%s5 + $0x108] sm:$0xff]
        %v1015 = vld [vmem:[%s5 + $0x110] sm:$0xff]
        %v1016 = vld [vmem:[%s5 + $0x118] sm:$0xff]
        %v1017 = vld [vmem:[%s6] sm:$0xff]
        %v1018 = vld [vmem:[%s6 + $0x8] sm:$0xff]
        %v1019 = vld [vmem:[%s6 + $0x10] sm:$0xff]
        %v1020 = vld [vmem:[%s6 + $0x18] sm:$0xff]
        %1022 = vset.pattern.permute.xlu0 0
        %1023 = vperm.xlu0 %1022, %v997
        %v1024 = vpop.permute.xlu0 %1023
        %1027 = vset.pattern.permute.xlu0 0
        %1028 = vperm.xlu0 %1027, %v998
        %v1029 = vpop.permute.xlu0 %1028
        %1032 = vset.pattern.permute.xlu0 0
        %1033 = vperm.xlu0 %1032, %v999
        %v1034 = vpop.permute.xlu0 %1033
        %1037 = vset.pattern.permute.xlu0 0
        %1038 = vperm.xlu0 %1037, %v1000
        %v1039 = vpop.permute.xlu0 %1038
        %v1041 = vmul.f32 %v1024, %v874
        %v1042 = vmul.f32 %v1024, %v875
        %v1043 = vmul.f32 %v1024, %v876
        %v1044 = vmul.f32 %v1024, %v877
        %v1045 = vmul.f32 %v1029, %v880
        %v1046 = vmul.f32 %v1029, %v881
        %v1047 = vmul.f32 %v1029, %v882
        %v1048 = vmul.f32 %v1029, %v883
        %v1049 = vmul.f32 %v1034, %v886
        %v1050 = vmul.f32 %v1034, %v887
        %v1051 = vmul.f32 %v1034, %v888
        %v1052 = vmul.f32 %v1034, %v889
        %v1053 = vmul.f32 %v1039, %v892
        %v1054 = vmul.f32 %v1039, %v893
        %v1055 = vmul.f32 %v1039, %v894
        %v1056 = vmul.f32 %v1039, %v895
        %1058 = vset.pattern.permute.xlu0 0
        %1059 = vperm.xlu0 %1058, %v1017
        %v1060 = vpop.permute.xlu0 %1059
        %1063 = vset.pattern.permute.xlu0 0
        %1064 = vperm.xlu0 %1063, %v1018
        %v1065 = vpop.permute.xlu0 %1064
        %1068 = vset.pattern.permute.xlu0 0
        %1069 = vperm.xlu0 %1068, %v1019
        %v1070 = vpop.permute.xlu0 %1069
        %1073 = vset.pattern.permute.xlu0 0
        %1074 = vperm.xlu0 %1073, %v1020
        %v1075 = vpop.permute.xlu0 %1074
        %v1077 = vadd.f32 %v1060, %v1041
        %v1078 = vadd.f32 %v1060, %v1042
        %v1079 = vadd.f32 %v1060, %v1043
        %v1080 = vadd.f32 %v1060, %v1044
        %v1081 = vadd.f32 %v1065, %v1045
        %v1082 = vadd.f32 %v1065, %v1046
        %v1083 = vadd.f32 %v1065, %v1047
        %v1084 = vadd.f32 %v1065, %v1048
        %v1085 = vadd.f32 %v1070, %v1049
        %v1086 = vadd.f32 %v1070, %v1050
        %v1087 = vadd.f32 %v1070, %v1051
        %v1088 = vadd.f32 %v1070, %v1052
        %v1089 = vadd.f32 %v1075, %v1053
        %v1090 = vadd.f32 %v1075, %v1054
        %v1091 = vadd.f32 %v1075, %v1055
        %v1092 = vadd.f32 %v1075, %v1056
        %1093 = vrot.lane.b32.xlu0 %v915, 1
        %v1094 = vpop.permute.xlu0 %1093
        %1095 = vrot.lane.b32.xlu0 %v921, 1
        %v1096 = vpop.permute.xlu0 %1095
        %1097 = vrot.lane.b32.xlu0 %v927, 1
        %v1098 = vpop.permute.xlu0 %1097
        %1099 = vrot.lane.b32.xlu0 %v933, 1
        %v1100 = vpop.permute.xlu0 %1099
        %1101 = vrot.lane.b32.xlu0 %v916, 1
        %v1102 = vpop.permute.xlu0 %1101
        %1103 = vrot.lane.b32.xlu0 %v922, 1
        %v1104 = vpop.permute.xlu0 %1103
        %1105 = vrot.lane.b32.xlu0 %v928, 1
        %v1106 = vpop.permute.xlu0 %1105
        %1107 = vrot.lane.b32.xlu0 %v934, 1
        %v1108 = vpop.permute.xlu0 %1107
        %1109 = vrot.lane.b32.xlu0 %v917, 1
        %v1110 = vpop.permute.xlu0 %1109
        %1111 = vrot.lane.b32.xlu0 %v923, 1
        %v1112 = vpop.permute.xlu0 %1111
        %1113 = vrot.lane.b32.xlu0 %v929, 1
        %v1114 = vpop.permute.xlu0 %1113
        %1115 = vrot.lane.b32.xlu0 %v935, 1
        %v1116 = vpop.permute.xlu0 %1115
        %1117 = vrot.lane.b32.xlu0 %v918, 1
        %v1118 = vpop.permute.xlu0 %1117
        %1119 = vrot.lane.b32.xlu0 %v924, 1
        %v1120 = vpop.permute.xlu0 %1119
        %1121 = vrot.lane.b32.xlu0 %v930, 1
        %v1122 = vpop.permute.xlu0 %1121
        %1123 = vrot.lane.b32.xlu0 %v936, 1
        %v1124 = vpop.permute.xlu0 %1123
        %1125 = vrot.lane.b32.xlu0 %v920, 1
        %v1126 = vpop.permute.xlu0 %1125
        %1127 = vrot.lane.b32.xlu0 %v926, 1
        %v1128 = vpop.permute.xlu0 %1127
        %1129 = vrot.lane.b32.xlu0 %v932, 1
        %v1130 = vpop.permute.xlu0 %1129
        %1131 = vrot.lane.b32.xlu0 %v938, 1
        %v1132 = vpop.permute.xlu0 %1131
        %vm1133 = vcmp.lt.s32.totalorder %v739, 1
        %v1134 = vsel %vm1133, %v1110, %v1118
        %v1135 = vsel %vm1133, %v1112, %v1120
        %v1136 = vsel %vm1133, %v1114, %v1122
        %v1137 = vsel %vm1133, %v1116, %v1124
        %v1138 = vsel %vm1133, %v1102, %v1110
        %v1139 = vsel %vm1133, %v1104, %v1112
        %v1140 = vsel %vm1133, %v1106, %v1114
        %v1141 = vsel %vm1133, %v1108, %v1116
        %v1142 = vsel %vm1133, %v1094, %v1102
        %v1143 = vsel %vm1133, %v1096, %v1104
        %v1144 = vsel %vm1133, %v1098, %v1106
        %v1145 = vsel %vm1133, %v1100, %v1108
        %v1146 = vsel %vm1133, %v1126, %v1094
        %v1147 = vsel %vm1133, %v1128, %v1096
        %v1148 = vsel %vm1133, %v1130, %v1098
        %v1149 = vsel %vm1133, %v1132, %v1100
        %1151 = vset.pattern.permute.xlu0 0
        %1152 = vperm.xlu0 %1151, %v981
        %v1153 = vpop.permute.xlu0 %1152
        %1156 = vset.pattern.permute.xlu0 0
        %1157 = vperm.xlu0 %1156, %v982
        %v1158 = vpop.permute.xlu0 %1157
        %1161 = vset.pattern.permute.xlu0 0
        %1162 = vperm.xlu0 %1161, %v983
        %v1163 = vpop.permute.xlu0 %1162
        %1166 = vset.pattern.permute.xlu0 0
        %1167 = vperm.xlu0 %1166, %v984
        %v1168 = vpop.permute.xlu0 %1167
        %v1170 = vmul.f32 %v1153, %v1146
        %v1171 = vmul.f32 %v1153, %v1142
        %v1172 = vmul.f32 %v1153, %v1138
        %v1173 = vmul.f32 %v1153, %v1134
        %v1174 = vmul.f32 %v1158, %v1147
        %v1175 = vmul.f32 %v1158, %v1143
        %v1176 = vmul.f32 %v1158, %v1139
        %v1177 = vmul.f32 %v1158, %v1135
        %v1178 = vmul.f32 %v1163, %v1148
        %v1179 = vmul.f32 %v1163, %v1144
        %v1180 = vmul.f32 %v1163, %v1140
        %v1181 = vmul.f32 %v1163, %v1136
        %v1182 = vmul.f32 %v1168, %v1149
        %v1183 = vmul.f32 %v1168, %v1145
        %v1184 = vmul.f32 %v1168, %v1141
        %v1185 = vmul.f32 %v1168, %v1137
        %v1186 = vadd.f32 %v1077, %v1170
        %v1187 = vadd.f32 %v1078, %v1171
        %v1188 = vadd.f32 %v1079, %v1172
        %v1189 = vadd.f32 %v1080, %v1173
        %v1190 = vadd.f32 %v1081, %v1174
        %v1191 = vadd.f32 %v1082, %v1175
        %v1192 = vadd.f32 %v1083, %v1176
        %v1193 = vadd.f32 %v1084, %v1177
        %v1194 = vadd.f32 %v1085, %v1178
        %v1195 = vadd.f32 %v1086, %v1179
        %v1196 = vadd.f32 %v1087, %v1180
        %v1197 = vadd.f32 %v1088, %v1181
        %v1198 = vadd.f32 %v1089, %v1182
        %v1199 = vadd.f32 %v1090, %v1183
        %v1200 = vadd.f32 %v1091, %v1184
        %v1201 = vadd.f32 %v1092, %v1185
        %1203 = vset.pattern.permute.xlu0 0
        %1204 = vperm.xlu0 %1203, %v985
        %v1205 = vpop.permute.xlu0 %1204
        %1208 = vset.pattern.permute.xlu0 0
        %1209 = vperm.xlu0 %1208, %v986
        %v1210 = vpop.permute.xlu0 %1209
        %1213 = vset.pattern.permute.xlu0 0
        %1214 = vperm.xlu0 %1213, %v987
        %v1215 = vpop.permute.xlu0 %1214
        %1218 = vset.pattern.permute.xlu0 0
        %1219 = vperm.xlu0 %1218, %v988
        %v1220 = vpop.permute.xlu0 %1219
        %v1222 = vmul.f32 %v1205, %v873
        %v1223 = vmul.f32 %v1205, %v874
        %v1224 = vmul.f32 %v1205, %v875
        %v1225 = vmul.f32 %v1205, %v876
        %v1226 = vmul.f32 %v1210, %v879
        %v1227 = vmul.f32 %v1210, %v880
        %v1228 = vmul.f32 %v1210, %v881
        %v1229 = vmul.f32 %v1210, %v882
        %v1230 = vmul.f32 %v1215, %v885
        %v1231 = vmul.f32 %v1215, %v886
        %v1232 = vmul.f32 %v1215, %v887
        %v1233 = vmul.f32 %v1215, %v888
        %v1234 = vmul.f32 %v1220, %v891
        %v1235 = vmul.f32 %v1220, %v892
        %v1236 = vmul.f32 %v1220, %v893
        %v1237 = vmul.f32 %v1220, %v894
        %v1238 = vadd.f32 %v1186, %v1222
        %v1239 = vadd.f32 %v1187, %v1223
        %v1240 = vadd.f32 %v1188, %v1224
        %v1241 = vadd.f32 %v1189, %v1225
        %v1242 = vadd.f32 %v1190, %v1226
        %v1243 = vadd.f32 %v1191, %v1227
        %v1244 = vadd.f32 %v1192, %v1228
        %v1245 = vadd.f32 %v1193, %v1229
        %v1246 = vadd.f32 %v1194, %v1230
        %v1247 = vadd.f32 %v1195, %v1231
        %v1248 = vadd.f32 %v1196, %v1232
        %v1249 = vadd.f32 %v1197, %v1233
        %v1250 = vadd.f32 %v1198, %v1234
        %v1251 = vadd.f32 %v1199, %v1235
        %v1252 = vadd.f32 %v1200, %v1236
        %v1253 = vadd.f32 %v1201, %v1237
        %1254 = vrot.lane.b32.xlu0 %v957, 127
        %v1255 = vpop.permute.xlu0 %1254
        %1256 = vrot.lane.b32.xlu0 %v963, 127
        %v1257 = vpop.permute.xlu0 %1256
        %1258 = vrot.lane.b32.xlu0 %v969, 127
        %v1259 = vpop.permute.xlu0 %1258
        %1260 = vrot.lane.b32.xlu0 %v975, 127
        %v1261 = vpop.permute.xlu0 %1260
        %1262 = vrot.lane.b32.xlu0 %v958, 127
        %v1263 = vpop.permute.xlu0 %1262
        %1264 = vrot.lane.b32.xlu0 %v964, 127
        %v1265 = vpop.permute.xlu0 %1264
        %1266 = vrot.lane.b32.xlu0 %v970, 127
        %v1267 = vpop.permute.xlu0 %1266
        %1268 = vrot.lane.b32.xlu0 %v976, 127
        %v1269 = vpop.permute.xlu0 %1268
        %1270 = vrot.lane.b32.xlu0 %v959, 127
        %v1271 = vpop.permute.xlu0 %1270
        %1272 = vrot.lane.b32.xlu0 %v965, 127
        %v1273 = vpop.permute.xlu0 %1272
        %1274 = vrot.lane.b32.xlu0 %v971, 127
        %v1275 = vpop.permute.xlu0 %1274
        %1276 = vrot.lane.b32.xlu0 %v977, 127
        %v1277 = vpop.permute.xlu0 %1276
        %1278 = vrot.lane.b32.xlu0 %v960, 127
        %v1279 = vpop.permute.xlu0 %1278
        %1280 = vrot.lane.b32.xlu0 %v966, 127
        %v1281 = vpop.permute.xlu0 %1280
        %1282 = vrot.lane.b32.xlu0 %v972, 127
        %v1283 = vpop.permute.xlu0 %1282
        %1284 = vrot.lane.b32.xlu0 %v978, 127
        %v1285 = vpop.permute.xlu0 %1284
        %1286 = vrot.lane.b32.xlu0 %v961, 127
        %v1287 = vpop.permute.xlu0 %1286
        %1288 = vrot.lane.b32.xlu0 %v967, 127
        %v1289 = vpop.permute.xlu0 %1288
        %1290 = vrot.lane.b32.xlu0 %v973, 127
        %v1291 = vpop.permute.xlu0 %1290
        %1292 = vrot.lane.b32.xlu0 %v979, 127
        %v1293 = vpop.permute.xlu0 %1292
        %vm1294 = vcmp.lt.s32.totalorder %v739, 127
        %v1295 = vsel %vm1294, %v1279, %v1287
        %v1296 = vsel %vm1294, %v1281, %v1289
        %v1297 = vsel %vm1294, %v1283, %v1291
        %v1298 = vsel %vm1294, %v1285, %v1293
        %v1299 = vsel %vm1294, %v1271, %v1279
        %v1300 = vsel %vm1294, %v1273, %v1281
        %v1301 = vsel %vm1294, %v1275, %v1283
        %v1302 = vsel %vm1294, %v1277, %v1285
        %v1303 = vsel %vm1294, %v1263, %v1271
        %v1304 = vsel %vm1294, %v1265, %v1273
        %v1305 = vsel %vm1294, %v1267, %v1275
        %v1306 = vsel %vm1294, %v1269, %v1277
        %v1307 = vsel %vm1294, %v1255, %v1263
        %v1308 = vsel %vm1294, %v1257, %v1265
        %v1309 = vsel %vm1294, %v1259, %v1267
        %v1310 = vsel %vm1294, %v1261, %v1269
        %1312 = vset.pattern.permute.xlu0 0
        %1313 = vperm.xlu0 %1312, %v989
        %v1314 = vpop.permute.xlu0 %1313
        %1317 = vset.pattern.permute.xlu0 0
        %1318 = vperm.xlu0 %1317, %v990
        %v1319 = vpop.permute.xlu0 %1318
        %1322 = vset.pattern.permute.xlu0 0
        %1323 = vperm.xlu0 %1322, %v991
        %v1324 = vpop.permute.xlu0 %1323
        %1327 = vset.pattern.permute.xlu0 0
        %1328 = vperm.xlu0 %1327, %v992
        %v1329 = vpop.permute.xlu0 %1328
        %v1331 = vmul.f32 %v1314, %v1307
        %v1332 = vmul.f32 %v1314, %v1303
        %v1333 = vmul.f32 %v1314, %v1299
        %v1334 = vmul.f32 %v1314, %v1295
        %v1335 = vmul.f32 %v1319, %v1308
        %v1336 = vmul.f32 %v1319, %v1304
        %v1337 = vmul.f32 %v1319, %v1300
        %v1338 = vmul.f32 %v1319, %v1296
        %v1339 = vmul.f32 %v1324, %v1309
        %v1340 = vmul.f32 %v1324, %v1305
        %v1341 = vmul.f32 %v1324, %v1301
        %v1342 = vmul.f32 %v1324, %v1297
        %v1343 = vmul.f32 %v1329, %v1310
        %v1344 = vmul.f32 %v1329, %v1306
        %v1345 = vmul.f32 %v1329, %v1302
        %v1346 = vmul.f32 %v1329, %v1298
        %v1347 = vadd.f32 %v1238, %v1331
        %v1348 = vadd.f32 %v1239, %v1332
        %v1349 = vadd.f32 %v1240, %v1333
        %v1350 = vadd.f32 %v1241, %v1334
        %v1351 = vadd.f32 %v1242, %v1335
        %v1352 = vadd.f32 %v1243, %v1336
        %v1353 = vadd.f32 %v1244, %v1337
        %v1354 = vadd.f32 %v1245, %v1338
        %v1355 = vadd.f32 %v1246, %v1339
        %v1356 = vadd.f32 %v1247, %v1340
        %v1357 = vadd.f32 %v1248, %v1341
        %v1358 = vadd.f32 %v1249, %v1342
        %v1359 = vadd.f32 %v1250, %v1343
        %v1360 = vadd.f32 %v1251, %v1344
        %v1361 = vadd.f32 %v1252, %v1345
        %v1362 = vadd.f32 %v1253, %v1346
        %1363 = vrot.lane.b32.xlu0 %v919, 1
        %v1364 = vpop.permute.xlu0 %1363
        %1365 = vrot.lane.b32.xlu0 %v925, 1
        %v1366 = vpop.permute.xlu0 %1365
        %1367 = vrot.lane.b32.xlu0 %v931, 1
        %v1368 = vpop.permute.xlu0 %1367
        %1369 = vrot.lane.b32.xlu0 %v937, 1
        %v1370 = vpop.permute.xlu0 %1369
        %v1371 = vsel %vm1133, %v1118, %v1364
        %v1372 = vsel %vm1133, %v1120, %v1366
        %v1373 = vsel %vm1133, %v1122, %v1368
        %v1374 = vsel %vm1133, %v1124, %v1370
        %1376 = vset.pattern.permute.xlu0 0
        %1377 = vperm.xlu0 %1376, %v993
        %v1378 = vpop.permute.xlu0 %1377
        %1381 = vset.pattern.permute.xlu0 0
        %1382 = vperm.xlu0 %1381, %v994
        %v1383 = vpop.permute.xlu0 %1382
        %1386 = vset.pattern.permute.xlu0 0
        %1387 = vperm.xlu0 %1386, %v995
        %v1388 = vpop.permute.xlu0 %1387
        %1391 = vset.pattern.permute.xlu0 0
        %1392 = vperm.xlu0 %1391, %v996
        %v1393 = vpop.permute.xlu0 %1392
        %v1395 = vmul.f32 %v1378, %v1142
        %v1396 = vmul.f32 %v1378, %v1138
        %v1397 = vmul.f32 %v1378, %v1134
        %v1398 = vmul.f32 %v1378, %v1371
        %v1399 = vmul.f32 %v1383, %v1143
        %v1400 = vmul.f32 %v1383, %v1139
        %v1401 = vmul.f32 %v1383, %v1135
        %v1402 = vmul.f32 %v1383, %v1372
        %v1403 = vmul.f32 %v1388, %v1144
        %v1404 = vmul.f32 %v1388, %v1140
        %v1405 = vmul.f32 %v1388, %v1136
        %v1406 = vmul.f32 %v1388, %v1373
        %v1407 = vmul.f32 %v1393, %v1145
        %v1408 = vmul.f32 %v1393, %v1141
        %v1409 = vmul.f32 %v1393, %v1137
        %v1410 = vmul.f32 %v1393, %v1374
        %v1411 = vadd.f32 %v1347, %v1395
        %v1412 = vadd.f32 %v1348, %v1396
        %v1413 = vadd.f32 %v1349, %v1397
        %v1414 = vadd.f32 %v1350, %v1398
        %v1415 = vadd.f32 %v1351, %v1399
        %v1416 = vadd.f32 %v1352, %v1400
        %v1417 = vadd.f32 %v1353, %v1401
        %v1418 = vadd.f32 %v1354, %v1402
        %v1419 = vadd.f32 %v1355, %v1403
        %v1420 = vadd.f32 %v1356, %v1404
        %v1421 = vadd.f32 %v1357, %v1405
        %v1422 = vadd.f32 %v1358, %v1406
        %v1423 = vadd.f32 %v1359, %v1407
        %v1424 = vadd.f32 %v1360, %v1408
        %v1425 = vadd.f32 %v1361, %v1409
        %v1426 = vadd.f32 %v1362, %v1410
        %1427 = vrot.lane.b32.xlu0 %v962, 127
        %v1428 = vpop.permute.xlu0 %1427
        %1429 = vrot.lane.b32.xlu0 %v968, 127
        %v1430 = vpop.permute.xlu0 %1429
        %1431 = vrot.lane.b32.xlu0 %v974, 127
        %v1432 = vpop.permute.xlu0 %1431
        %1433 = vrot.lane.b32.xlu0 %v980, 127
        %v1434 = vpop.permute.xlu0 %1433
        %v1435 = vsel %vm1294, %v1287, %v1428
        %v1436 = vsel %vm1294, %v1289, %v1430
        %v1437 = vsel %vm1294, %v1291, %v1432
        %v1438 = vsel %vm1294, %v1293, %v1434
        %1440 = vset.pattern.permute.xlu0 0
        %1441 = vperm.xlu0 %1440, %v1001
        %v1442 = vpop.permute.xlu0 %1441
        %1445 = vset.pattern.permute.xlu0 0
        %1446 = vperm.xlu0 %1445, %v1002
        %v1447 = vpop.permute.xlu0 %1446
        %1450 = vset.pattern.permute.xlu0 0
        %1451 = vperm.xlu0 %1450, %v1003
        %v1452 = vpop.permute.xlu0 %1451
        %1455 = vset.pattern.permute.xlu0 0
        %1456 = vperm.xlu0 %1455, %v1004
        %v1457 = vpop.permute.xlu0 %1456
        %v1459 = vmul.f32 %v1442, %v1303
        %v1460 = vmul.f32 %v1442, %v1299
        %v1461 = vmul.f32 %v1442, %v1295
        %v1462 = vmul.f32 %v1442, %v1435
        %v1463 = vmul.f32 %v1447, %v1304
        %v1464 = vmul.f32 %v1447, %v1300
        %v1465 = vmul.f32 %v1447, %v1296
        %v1466 = vmul.f32 %v1447, %v1436
        %v1467 = vmul.f32 %v1452, %v1305
        %v1468 = vmul.f32 %v1452, %v1301
        %v1469 = vmul.f32 %v1452, %v1297
        %v1470 = vmul.f32 %v1452, %v1437
        %v1471 = vmul.f32 %v1457, %v1306
        %v1472 = vmul.f32 %v1457, %v1302
        %v1473 = vmul.f32 %v1457, %v1298
        %v1474 = vmul.f32 %v1457, %v1438
        %v1475 = vadd.f32 %v1411, %v1459
        %v1476 = vadd.f32 %v1412, %v1460
        %v1477 = vadd.f32 %v1413, %v1461
        %v1478 = vadd.f32 %v1414, %v1462
        %v1479 = vadd.f32 %v1415, %v1463
        %v1480 = vadd.f32 %v1416, %v1464
        %v1481 = vadd.f32 %v1417, %v1465
        %v1482 = vadd.f32 %v1418, %v1466
        %v1483 = vadd.f32 %v1419, %v1467
        %v1484 = vadd.f32 %v1420, %v1468
        %v1485 = vadd.f32 %v1421, %v1469
        %v1486 = vadd.f32 %v1422, %v1470
        %v1487 = vadd.f32 %v1423, %v1471
        %v1488 = vadd.f32 %v1424, %v1472
        %v1489 = vadd.f32 %v1425, %v1473
        %v1490 = vadd.f32 %v1426, %v1474
        %v1491 = vsel %vm1133, %v1364, %v1126
        %v1492 = vsel %vm1133, %v1366, %v1128
        %v1493 = vsel %vm1133, %v1368, %v1130
        %v1494 = vsel %vm1133, %v1370, %v1132
        %1496 = vset.pattern.permute.xlu0 0
        %1497 = vperm.xlu0 %1496, %v1005
        %v1498 = vpop.permute.xlu0 %1497
        %1501 = vset.pattern.permute.xlu0 0
        %1502 = vperm.xlu0 %1501, %v1006
        %v1503 = vpop.permute.xlu0 %1502
        %1506 = vset.pattern.permute.xlu0 0
        %1507 = vperm.xlu0 %1506, %v1007
        %v1508 = vpop.permute.xlu0 %1507
        %1511 = vset.pattern.permute.xlu0 0
        %1512 = vperm.xlu0 %1511, %v1008
        %v1513 = vpop.permute.xlu0 %1512
        %v1515 = vmul.f32 %v1498, %v1138
        %v1516 = vmul.f32 %v1498, %v1134
        %v1517 = vmul.f32 %v1498, %v1371
        %v1518 = vmul.f32 %v1498, %v1491
        %v1519 = vmul.f32 %v1503, %v1139
        %v1520 = vmul.f32 %v1503, %v1135
        %v1521 = vmul.f32 %v1503, %v1372
        %v1522 = vmul.f32 %v1503, %v1492
        %v1523 = vmul.f32 %v1508, %v1140
        %v1524 = vmul.f32 %v1508, %v1136
        %v1525 = vmul.f32 %v1508, %v1373
        %v1526 = vmul.f32 %v1508, %v1493
        %v1527 = vmul.f32 %v1513, %v1141
        %v1528 = vmul.f32 %v1513, %v1137
        %v1529 = vmul.f32 %v1513, %v1374
        %v1530 = vmul.f32 %v1513, %v1494
        %v1531 = vadd.f32 %v1475, %v1515
        %v1532 = vadd.f32 %v1476, %v1516
        %v1533 = vadd.f32 %v1477, %v1517
        %v1534 = vadd.f32 %v1478, %v1518
        %v1535 = vadd.f32 %v1479, %v1519
        %v1536 = vadd.f32 %v1480, %v1520
        %v1537 = vadd.f32 %v1481, %v1521
        %v1538 = vadd.f32 %v1482, %v1522
        %v1539 = vadd.f32 %v1483, %v1523
        %v1540 = vadd.f32 %v1484, %v1524
        %v1541 = vadd.f32 %v1485, %v1525
        %v1542 = vadd.f32 %v1486, %v1526
        %v1543 = vadd.f32 %v1487, %v1527
        %v1544 = vadd.f32 %v1488, %v1528
        %v1545 = vadd.f32 %v1489, %v1529
        %v1546 = vadd.f32 %v1490, %v1530
        %1548 = vset.pattern.permute.xlu0 0
        %1549 = vperm.xlu0 %1548, %v1009
        %v1550 = vpop.permute.xlu0 %1549
        %1553 = vset.pattern.permute.xlu0 0
        %1554 = vperm.xlu0 %1553, %v1010
        %v1555 = vpop.permute.xlu0 %1554
        %1558 = vset.pattern.permute.xlu0 0
        %1559 = vperm.xlu0 %1558, %v1011
        %v1560 = vpop.permute.xlu0 %1559
        %1563 = vset.pattern.permute.xlu0 0
        %1564 = vperm.xlu0 %1563, %v1012
        %v1565 = vpop.permute.xlu0 %1564
        %v1567 = vmul.f32 %v1550, %v875
        %v1568 = vmul.f32 %v1550, %v876
        %v1569 = vmul.f32 %v1550, %v877
        %v1570 = vmul.f32 %v1550, %v878
        %v1571 = vmul.f32 %v1555, %v881
        %v1572 = vmul.f32 %v1555, %v882
        %v1573 = vmul.f32 %v1555, %v883
        %v1574 = vmul.f32 %v1555, %v884
        %v1575 = vmul.f32 %v1560, %v887
        %v1576 = vmul.f32 %v1560, %v888
        %v1577 = vmul.f32 %v1560, %v889
        %v1578 = vmul.f32 %v1560, %v890
        %v1579 = vmul.f32 %v1565, %v893
        %v1580 = vmul.f32 %v1565, %v894
        %v1581 = vmul.f32 %v1565, %v895
        %v1582 = vmul.f32 %v1565, %v896
        %v1583 = vadd.f32 %v1531, %v1567
        %v1584 = vadd.f32 %v1532, %v1568
        %v1585 = vadd.f32 %v1533, %v1569
        %v1586 = vadd.f32 %v1534, %v1570
        %v1587 = vadd.f32 %v1535, %v1571
        %v1588 = vadd.f32 %v1536, %v1572
        %v1589 = vadd.f32 %v1537, %v1573
        %v1590 = vadd.f32 %v1538, %v1574
        %v1591 = vadd.f32 %v1539, %v1575
        %v1592 = vadd.f32 %v1540, %v1576
        %v1593 = vadd.f32 %v1541, %v1577
        %v1594 = vadd.f32 %v1542, %v1578
        %v1595 = vadd.f32 %v1543, %v1579
        %v1596 = vadd.f32 %v1544, %v1580
        %v1597 = vadd.f32 %v1545, %v1581
        %v1598 = vadd.f32 %v1546, %v1582
        %v1599 = vsel %vm1294, %v1428, %v1255
        %v1600 = vsel %vm1294, %v1430, %v1257
        %v1601 = vsel %vm1294, %v1432, %v1259
        %v1602 = vsel %vm1294, %v1434, %v1261
        %1604 = vset.pattern.permute.xlu0 0
        %1605 = vperm.xlu0 %1604, %v1013
        %v1606 = vpop.permute.xlu0 %1605
        %1609 = vset.pattern.permute.xlu0 0
        %1610 = vperm.xlu0 %1609, %v1014
        %v1611 = vpop.permute.xlu0 %1610
        %1614 = vset.pattern.permute.xlu0 0
        %1615 = vperm.xlu0 %1614, %v1015
        %v1616 = vpop.permute.xlu0 %1615
        %1619 = vset.pattern.permute.xlu0 0
        %1620 = vperm.xlu0 %1619, %v1016
        %v1621 = vpop.permute.xlu0 %1620
        %v1623 = vmul.f32 %v1606, %v1299
        %v1624 = vmul.f32 %v1606, %v1295
        %v1625 = vmul.f32 %v1606, %v1435
        %v1626 = vmul.f32 %v1606, %v1599
        %v1627 = vmul.f32 %v1611, %v1300
        %v1628 = vmul.f32 %v1611, %v1296
        %v1629 = vmul.f32 %v1611, %v1436
        %v1630 = vmul.f32 %v1611, %v1600
        %v1631 = vmul.f32 %v1616, %v1301
        %v1632 = vmul.f32 %v1616, %v1297
        %v1633 = vmul.f32 %v1616, %v1437
        %v1634 = vmul.f32 %v1616, %v1601
        %v1635 = vmul.f32 %v1621, %v1302
        %v1636 = vmul.f32 %v1621, %v1298
        %v1637 = vmul.f32 %v1621, %v1438
        %v1638 = vmul.f32 %v1621, %v1602
        %v1639 = vadd.f32 %v1583, %v1623
        %v1640 = vadd.f32 %v1584, %v1624
        %v1641 = vadd.f32 %v1585, %v1625
        %v1642 = vadd.f32 %v1586, %v1626
        %v1643 = vadd.f32 %v1587, %v1627
        %v1644 = vadd.f32 %v1588, %v1628
        %v1645 = vadd.f32 %v1589, %v1629
        %v1646 = vadd.f32 %v1590, %v1630
        %v1647 = vadd.f32 %v1591, %v1631
        %v1648 = vadd.f32 %v1592, %v1632
        %v1649 = vadd.f32 %v1593, %v1633
        %v1650 = vadd.f32 %v1594, %v1634
        %v1651 = vadd.f32 %v1595, %v1635
        %v1652 = vadd.f32 %v1596, %v1636
        %v1653 = vadd.f32 %v1597, %v1637
        %v1654 = vadd.f32 %v1598, %v1638
        %v1655 = vmul.f32 %v1639, 0.5
        %v1656 = vmul.f32 %v1640, 0.5
        %v1657 = vmul.f32 %v1641, 0.5
        %v1658 = vmul.f32 %v1642, 0.5
        %v1659 = vmul.f32 %v1643, 0.5
        %v1660 = vmul.f32 %v1644, 0.5
        %v1661 = vmul.f32 %v1645, 0.5
        %v1662 = vmul.f32 %v1646, 0.5
        %v1663 = vmul.f32 %v1655, %v1647
        %v1664 = vmul.f32 %v1656, %v1648
        %v1665 = vmul.f32 %v1657, %v1649
        %v1666 = vmul.f32 %v1658, %v1650
        %v1667 = vmul.f32 %v1659, %v1651
        %v1668 = vmul.f32 %v1660, %v1652
        %v1669 = vmul.f32 %v1661, %v1653
        %v1670 = vmul.f32 %v1662, %v1654
        %v1671 = vmul.f32 %v1639, 0.70710677
        %v1672 = vmul.f32 %v1640, 0.70710677
        %v1673 = vmul.f32 %v1641, 0.70710677
        %v1674 = vmul.f32 %v1642, 0.70710677
        %v1675 = vmul.f32 %v1643, 0.70710677
        %v1676 = vmul.f32 %v1644, 0.70710677
        %v1677 = vmul.f32 %v1645, 0.70710677
        %v1678 = vmul.f32 %v1646, 0.70710677
        %v1679 = verf.f32.pop %v1671
        %v1680 = verf.f32.pop %v1672
        %v1681 = verf.f32.pop %v1673
        %v1682 = verf.f32.pop %v1674
        %v1683 = verf.f32.pop %v1675
        %v1684 = verf.f32.pop %v1676
        %v1685 = verf.f32.pop %v1677
        %v1686 = verf.f32.pop %v1678
        %v1687 = vadd.f32 %v1679, 2.0
        %v1688 = vadd.f32 %v1680, 2.0
        %v1689 = vadd.f32 %v1681, 2.0
        %v1690 = vadd.f32 %v1682, 2.0
        %v1691 = vadd.f32 %v1683, 2.0
        %v1692 = vadd.f32 %v1684, 2.0
        %v1693 = vadd.f32 %v1685, 2.0
        %v1694 = vadd.f32 %v1686, 2.0
        %v1695 = vmul.f32 %v1647, 0.70710677
        %v1696 = vmul.f32 %v1648, 0.70710677
        %v1697 = vmul.f32 %v1649, 0.70710677
        %v1698 = vmul.f32 %v1650, 0.70710677
        %v1699 = vmul.f32 %v1651, 0.70710677
        %v1700 = vmul.f32 %v1652, 0.70710677
        %v1701 = vmul.f32 %v1653, 0.70710677
        %v1702 = vmul.f32 %v1654, 0.70710677
        %v1703 = verf.f32.pop %v1695
        %v1704 = verf.f32.pop %v1696
        %v1705 = verf.f32.pop %v1697
        %v1706 = verf.f32.pop %v1698
        %v1707 = verf.f32.pop %v1699
        %v1708 = verf.f32.pop %v1700
        %v1709 = verf.f32.pop %v1701
        %v1710 = verf.f32.pop %v1702
        %v1711 = vadd.f32 %v1687, %v1703
        %v1712 = vadd.f32 %v1688, %v1704
        %v1713 = vadd.f32 %v1689, %v1705
        %v1714 = vadd.f32 %v1690, %v1706
        %v1715 = vadd.f32 %v1691, %v1707
        %v1716 = vadd.f32 %v1692, %v1708
        %v1717 = vadd.f32 %v1693, %v1709
        %v1718 = vadd.f32 %v1694, %v1710
        %v1719 = vmul.f32 %v1663, %v1711
        %v1720 = vmul.f32 %v1664, %v1712
        %v1721 = vmul.f32 %v1665, %v1713
        %v1722 = vmul.f32 %v1666, %v1714
        %v1723 = vmul.f32 %v1667, %v1715
        %v1724 = vmul.f32 %v1668, %v1716
        %v1725 = vmul.f32 %v1669, %v1717
        %v1726 = vmul.f32 %v1670, %v1718
        %v1727 = vld [vmem:[%s7] sm:$0xff]
        %v1728 = vld [vmem:[%s8] sm:$0xff]
        %1730 = vset.pattern.permute.xlu0 0
        %1731 = vperm.xlu0 %1730, %v1728
        %v1732 = vpop.permute.xlu0 %1731
        %vm1734 = vcmask 130048
        %v1736 = vsel %vm1734, %v1727, 0
        %1738 = vmatprep.subr.mxu0 %v1720
        %1739 = vmatpush1.msra.mxu0 %v1719
        %1740 = vmatprep.subr.mxu0 %v1724
        %1741 = vmatpush1.msra.mxu0 %v1723
        %1742 = vmatprep.subr.mxu0 0.0
        %1743 = vmatpush1.msra.mxu0 0.0
        %1744 = vmatprep.subr.mxu0 0.0
        %1745 = vmatpush1.msra.mxu0 0.0
        %1746 = vmatprep.subr.mxu0 0.0
        %1747 = vmatpush1.msra.mxu0 0.0
        %1748 = vmatprep.subr.mxu0 0.0
        %1749 = vmatpush1.msra.mxu0 0.0
        %1750 = vmatprep.subr.mxu0 0.0
        %1751 = vmatpush1.msra.mxu0 0.0
        %1752 = vmatprep.subr.mxu0 0.0
        %1753 = vmatpush1.msra.mxu0 0.0
        %1754 = vmatprep.subr.mxu0 0.0
        %1755 = vmatpush1.msra.mxu0 0.0
        %1756 = vmatprep.subr.mxu0 0.0
        %1757 = vmatpush1.msra.mxu0 0.0
        %1758 = vmatprep.subr.mxu0 0.0
        %1759 = vmatpush1.msra.mxu0 0.0
        %1760 = vmatprep.subr.mxu0 0.0
        %1761 = vmatpush1.msra.mxu0 0.0
        %1762 = vmatprep.subr.mxu0 0.0
        %1763 = vmatpush1.msra.mxu0 0.0
        %1764 = vmatprep.subr.mxu0 0.0
        %1765 = vmatpush1.msra.mxu0 0.0
        %1766 = vmatprep.subr.mxu0 0.0
        %1767 = vmatpush1.msra.mxu0 0.0
        %1768 = vmatprep.subr.mxu0 0.0
        %1769 = vmatpush1.msra.mxu0 0.0
        %1770 = vmatprep.subr.mxu0 0.0
        %1771 = vmatpush1.msra.mxu0 0.0
        %1772 = vmatprep.subr.mxu0 0.0
        %1773 = vmatpush1.msra.mxu0 0.0
        %1774 = vmatprep.subr.mxu0 0.0
        %1775 = vmatpush1.msra.mxu0 0.0
        %1776 = vmatprep.subr.mxu0 0.0
        %1777 = vmatpush1.msra.mxu0 0.0
        %1778 = vmatprep.subr.mxu0 0.0
        %1779 = vmatpush1.msra.mxu0 0.0
        %1780 = vmatprep.subr.mxu0 0.0
        %1781 = vmatpush1.msra.mxu0 0.0
        %1782 = vmatprep.subr.mxu0 0.0
        %1783 = vmatpush1.msra.mxu0 0.0
        %1784 = vmatprep.subr.mxu0 0.0
        %1785 = vmatpush1.msra.mxu0 0.0
        %1786 = vmatprep.subr.mxu0 0.0
        %1787 = vmatpush1.msra.mxu0 0.0
        %1788 = vmatprep.subr.mxu0 0.0
        %1789 = vmatpush1.msra.mxu0 0.0
        %1790 = vmatprep.subr.mxu0 0.0
        %1791 = vmatpush1.msra.mxu0 0.0
        %1792 = vmatprep.subr.mxu0 0.0
        %1793 = vmatpush1.msra.mxu0 0.0
        %1794 = vmatprep.subr.mxu0 0.0
        %1795 = vmatpush1.msra.mxu0 0.0
        %1796 = vmatprep.subr.mxu0 0.0
        %1797 = vmatpush1.msra.mxu0 0.0
        %1798 = vmatprep.subr.mxu0 0.0
        %1799 = vmatpush1.msra.mxu0 0.0
        %1800 = vmatprep.subr.mxu0 0.0
        %1801 = vmatpush1.msra.mxu0 0.0
        %1802 = vmatprep.mubr.f32.mxu0 0.0
        %1803 = vmatmul.mubr.f32.gmra.mrb[0].mxu0 %v1736
        %v1804 = vpop.f32.mrb[0].mxu0
        %v1805 = vadd.f32 %v1732, %v1804
        %v1806 = vpop.f32.mrb[0].mxu0
        %v1807 = vadd.f32 %v1732, %v1806
        %1808 = vdwg.mxu0
        %1809 = vmatprep.subr.mxu0 %v1722
        %1810 = vmatpush1.msra.mxu0 %v1721
        %1811 = vmatprep.subr.mxu0 %v1726
        %1812 = vmatpush1.msra.mxu0 %v1725
        %1813 = vmatprep.subr.mxu0 0.0
        %1814 = vmatpush1.msra.mxu0 0.0
        %1815 = vmatprep.subr.mxu0 0.0
        %1816 = vmatpush1.msra.mxu0 0.0
        %1817 = vmatprep.subr.mxu0 0.0
        %1818 = vmatpush1.msra.mxu0 0.0
        %1819 = vmatprep.subr.mxu0 0.0
        %1820 = vmatpush1.msra.mxu0 0.0
        %1821 = vmatprep.subr.mxu0 0.0
        %1822 = vmatpush1.msra.mxu0 0.0
        %1823 = vmatprep.subr.mxu0 0.0
        %1824 = vmatpush1.msra.mxu0 0.0
        %1825 = vmatprep.subr.mxu0 0.0
        %1826 = vmatpush1.msra.mxu0 0.0
        %1827 = vmatprep.subr.mxu0 0.0
        %1828 = vmatpush1.msra.mxu0 0.0
        %1829 = vmatprep.subr.mxu0 0.0
        %1830 = vmatpush1.msra.mxu0 0.0
        %1831 = vmatprep.subr.mxu0 0.0
        %1832 = vmatpush1.msra.mxu0 0.0
        %1833 = vmatprep.subr.mxu0 0.0
        %1834 = vmatpush1.msra.mxu0 0.0
        %1835 = vmatprep.subr.mxu0 0.0
        %1836 = vmatpush1.msra.mxu0 0.0
        %1837 = vmatprep.subr.mxu0 0.0
        %1838 = vmatpush1.msra.mxu0 0.0
        %1839 = vmatprep.subr.mxu0 0.0
        %1840 = vmatpush1.msra.mxu0 0.0
        %1841 = vmatprep.subr.mxu0 0.0
        %1842 = vmatpush1.msra.mxu0 0.0
        %1843 = vmatprep.subr.mxu0 0.0
        %1844 = vmatpush1.msra.mxu0 0.0
        %1845 = vmatprep.subr.mxu0 0.0
        %1846 = vmatpush1.msra.mxu0 0.0
        %1847 = vmatprep.subr.mxu0 0.0
        %1848 = vmatpush1.msra.mxu0 0.0
        %1849 = vmatprep.subr.mxu0 0.0
        %1850 = vmatpush1.msra.mxu0 0.0
        %1851 = vmatprep.subr.mxu0 0.0
        %1852 = vmatpush1.msra.mxu0 0.0
        %1853 = vmatprep.subr.mxu0 0.0
        %1854 = vmatpush1.msra.mxu0 0.0
        %1855 = vmatprep.subr.mxu0 0.0
        %1856 = vmatpush1.msra.mxu0 0.0
        %1857 = vmatprep.subr.mxu0 0.0
        %1858 = vmatpush1.msra.mxu0 0.0
        %1859 = vmatprep.subr.mxu0 0.0
        %1860 = vmatpush1.msra.mxu0 0.0
        %1861 = vmatprep.subr.mxu0 0.0
        %1862 = vmatpush1.msra.mxu0 0.0
        %1863 = vmatprep.subr.mxu0 0.0
        %1864 = vmatpush1.msra.mxu0 0.0
        %1865 = vmatprep.subr.mxu0 0.0
        %1866 = vmatpush1.msra.mxu0 0.0
        %1867 = vmatprep.subr.mxu0 0.0
        %1868 = vmatpush1.msra.mxu0 0.0
        %1869 = vmatprep.subr.mxu0 0.0
        %1870 = vmatpush1.msra.mxu0 0.0
        %1871 = vmatprep.subr.mxu0 0.0
        %1872 = vmatpush1.msra.mxu0 0.0
        %1873 = vmatprep.mubr.f32.mxu0 0.0
        %1874 = vmatmul.mubr.f32.gmra.mrb[0].mxu0 %v1736
        %v1875 = vpop.f32.mrb[0].mxu0
        %v1876 = vadd.f32 %v1732, %v1875
        %v1877 = vpop.f32.mrb[0].mxu0
        %v1878 = vadd.f32 %v1732, %v1877
        %1879 = vdwg.mxu0
        %1880 = vst [vmem:[%s396] sm:$0xff] %v1805
        %1881 = vst [vmem:[%s396 + $0x8] sm:$0xff] %v1807
        %1882 = vst [vmem:[%s396 + $0x10] sm:$0xff] %v1876
        %1883 = vst [vmem:[%s396 + $0x18] sm:$0xff] %v1878
        %s1884 = sand.u32 %s255, 1
        %s1885 = scalar_lea.sflag [#allocation3], %s1884
        %s1886 = sand.u32 %s255, 1
        %s1887 = smul.addr %s1886, 32
        %s1888 = scalar_lea.vmem [#allocation2], %s1887
        // Predicated region
        $region57: #{tpu_custom_call.1} parent=55 // pred_check
          %p1889 = pneg %p265
        $region58: #{tpu_custom_call.1} parent=55 // pred_check_branch
          %1891 = sbr.rel (%p1889) target = $region60
        $region59: #{tpu_custom_call.1} parent=55 // pred_region
          %s1892 = smul.u32 4, %s28
          %s1894 = ssub.s32 512, 512
          %1895 = vsyncadd %s1885, %s1894
          %s1896 = smul.addr %s27, 16
          %s1897 = sadd.s32 %s1892, %s1896
          %s1898 = smul.addr %s1897, 128
          %s1899 = scalar_lea.hbm %s9, %s1898
          %s1901 = sshll.u32 %s1888, 4
          %s1902 = int_to_ptr.vmem [resolvable:$true] %s1901
          %1904 = dma.vmem_to_hbm [thread:$0]  %s1902, 512, %s1899, %s1885
        $region60: #{tpu_custom_call.1} parent=55 // pred_fallthru
          _
      $region56: #{tpu_custom_call.1} parent=5 // pred_fallthru
        _
      %p1905 = scmp.le.s32.totalorder 2, %s18
      // Predicated region
      $region61: #{tpu_custom_call.1} parent=5 // pred_check
        %p1906 = pneg %p1905
      $region62: #{tpu_custom_call.1} parent=5 // pred_check_branch
        %1908 = sbr.rel (%p1906) target = $region64
      $region63: #{tpu_custom_call.1} parent=5 // pred_region
        %s1909 = ssub.s32 %s18, 2
        // Predicated region
        $region65: #{tpu_custom_call.1} parent=63 // pred_check
          %p1910 = pneg %p271
        $region66: #{tpu_custom_call.1} parent=63 // pred_check_branch
          %1912 = sbr.rel (%p1910) target = $region68
        $region67: #{tpu_custom_call.1} parent=63 // pred_region
          %s1913 = sand.u32 %s256, 1
          %s1914 = scalar_lea.sflag [#allocation3], %s1913
          %s1915 = sand.u32 %s256, 1
          %s1916 = smul.addr %s1915, 32
          %s1917 = scalar_lea.vmem [#allocation2], %s1916
          %1918 = dma.done %s1914, 512
        $region68: #{tpu_custom_call.1} parent=63 // pred_fallthru
          _
      $region64: #{tpu_custom_call.1} parent=5 // pred_fallthru
        _
    $region6: #{tpu_custom_call.1} parent=1 // loop_footer
      %s22 = sadd.s32 1, %s18
    $region7: #{tpu_custom_call.1} parent=1 // loop_footer_branch
      %17 = sbr.rel target = $region3
    $region8: #{tpu_custom_call.1} parent=1 // loop_exit
      _
    %1919 = vsyncpa [#allocation3], 1
    %s1920 = scalar_lea.sflag [#allocation3], 1
    %1921 = vsyncpa %s1920, 1

</llo_original>
